<compile_context>
chip_gen: v7x
topology: tpu7x:2x2x1
jax: 0.10.0
libtpu: 0.0.40
codegen_flags: <defaults>
</compile_context>

<pallas_src>
import functools

import jax
import jax.numpy as jnp
from jax.experimental import pallas as pl
from jax.experimental.pallas import tpu as pltpu  # noqa: F401  (TPU backend assumed)


def fused_lstm_kernel(*refs, num_layers, hidden, seq_len, batch):
    """Whole model in one kernel invocation (no grid).

    refs = [x, (w_ih_T, w_hh_T, bias) * num_layers, fc_w_row, fc_b, out]
      x        : (B, T, D)    batch-first input
      w_ih_T   : (Din, 4H)    input->gates weights (transposed, PyTorch gate order i,f,g,o)
      w_hh_T   : (H, 4H)      hidden->gates weights (transposed)
      bias     : (1, 4H)      b_ih + b_hh
      fc_w_row : (1, H)       final Linear weight (row form)
      fc_b     : (1, 1)
      out      : (B, 1)
    """
    H, T, B = hidden, seq_len, batch

    x_ref = refs[0]
    layer_refs = refs[1:1 + 3 * num_layers]
    fc_w_ref = refs[1 + 3 * num_layers]
    fc_b_ref = refs[2 + 3 * num_layers]
    out_ref = refs[3 + 3 * num_layers]

    x = x_ref[...].astype(jnp.float32)                       # (B, T, D)

    # Time-major flattened sequence, rows ordered t*B + b (built once, statically).
    cur = jnp.concatenate([x[:, t, :] for t in range(T)], axis=0)   # (T*B, D)

    h_last = None
    for layer in range(num_layers):
        wih = layer_refs[3 * layer][...]                     # (Din, 4H)
        whh = layer_refs[3 * layer + 1][...]                 # (H, 4H)
        bias = layer_refs[3 * layer + 2][...]                # (1, 4H)

        # Hoisted input projection for the whole sequence: one matmul + one bias add.
        gx = jnp.dot(cur, wih, preferred_element_type=jnp.float32) + bias   # (T*B, 4H)

        h = jnp.zeros((B, H), jnp.float32)
        c = jnp.zeros((B, H), jnp.float32)
        is_last = layer == num_layers - 1
        outs = []

        for t in range(T):                                   # statically unrolled recurrence
            gates = gx[t * B:(t + 1) * B, :] + jnp.dot(
                h, whh, preferred_element_type=jnp.float32)  # (B, 4H)

            # Full-width nonlinearities on the whole 4H-wide gate block.
            sig = jax.nn.sigmoid(gates)
            tnh = jnp.tanh(gates)
            i_g = sig[:, 0 * H:1 * H]
            f_g = sig[:, 1 * H:2 * H]
            g_g = tnh[:, 2 * H:3 * H]
            o_g = sig[:, 3 * H:4 * H]

            c = f_g * c + i_g * g_g
            h = o_g * jnp.tanh(c)
            if not is_last:
                outs.append(h)

        if is_last:
            h_last = h                                       # == out[:, -1, :] of the stack
        else:
            cur = jnp.concatenate(outs, axis=0)              # (T*B, H), time-major

    # FC head folded in as a VPU reduction: (B, H) * (1, H) -> sum over H -> (B, 1).
    out = jnp.sum(h_last * fc_w_ref[...], axis=-1, keepdims=True) + fc_b_ref[...]
    out_ref[...] = out.astype(out_ref.dtype)


def lstm_model_forward(x_btd, params):
    """x_btd: (B, T, input_size) batch-first, like the PyTorch module. Returns (B, 1)."""
    B, T, _ = x_btd.shape
    layers = params["lstm"]
    L = len(layers)
    H = layers[0]["whh_t"].shape[0]

    flat_weights = []
    for lyr in layers:
        flat_weights += [lyr["wih_t"], lyr["whh_t"], lyr["b"]]

    kernel = functools.partial(
        fused_lstm_kernel, num_layers=L, hidden=H, seq_len=T, batch=B)

    return pl.pallas_call(
        kernel,
        out_shape=jax.ShapeDtypeStruct((B, 1), jnp.float32),
    )(x_btd.astype(jnp.float32), *flat_weights, params["fc_w_row"], params["fc_b"])


def init_params(key, input_size, hidden_size, num_stacked_layers):
    """Deterministic init mirroring PyTorch nn.LSTM / nn.Linear shapes & gate order."""
    k = 1.0 / jnp.sqrt(jnp.float32(hidden_size))
    layers = []
    for layer in range(num_stacked_layers):
        d_in = input_size if layer == 0 else hidden_size
        key, k1, k2, k3, k4 = jax.random.split(key, 5)
        w_ih = jax.random.uniform(k1, (4 * hidden_size, d_in), jnp.float32, -k, k)
        w_hh = jax.random.uniform(k2, (4 * hidden_size, hidden_size), jnp.float32, -k, k)
        b_ih = jax.random.uniform(k3, (4 * hidden_size,), jnp.float32, -k, k)
        b_hh = jax.random.uniform(k4, (4 * hidden_size,), jnp.float32, -k, k)
        layers.append({
            "wih_t": w_ih.T,                                  # (Din, 4H)
            "whh_t": w_hh.T,                                  # (H, 4H)
            "b": (b_ih + b_hh).reshape(1, 4 * hidden_size),   # combined bias
        })
    key, k5, k6 = jax.random.split(key, 3)
    fc_w = jax.random.uniform(k5, (1, hidden_size), jnp.float32, -k, k)   # row form
    fc_b = jax.random.uniform(k6, (1,), jnp.float32, -k, k)
    return {"lstm": layers, "fc_w_row": fc_w, "fc_b": fc_b.reshape(1, 1)}


if __name__ == "__main__":
    input_size = 4
    hidden_size = 32
    num_stacked_layers = 2
    batch = 2
    seq_len = 8

    key = jax.random.PRNGKey(0)
    key_p, key_x = jax.random.split(key)
    params = init_params(key_p, input_size, hidden_size, num_stacked_layers)
    x = jax.random.normal(key_x, (batch, seq_len, input_size), jnp.float32)

    out = lstm_model_forward(x, params)
    jax.block_until_ready(out)
    assert out.shape == (batch, 1)
    print("KERNEL_OK")
</pallas_src>

<mosaic_0001>
module attributes {stable_mosaic.version = 11 : i64} {
  func.func @fused_lstm_kernel(%arg0: memref<2x8x4xf32, #tpu.memory_space<vmem>>, %arg1: memref<4x128xf32, #tpu.memory_space<vmem>>, %arg2: memref<32x128xf32, #tpu.memory_space<vmem>>, %arg3: memref<1x128xf32, #tpu.memory_space<vmem>>, %arg4: memref<32x128xf32, #tpu.memory_space<vmem>>, %arg5: memref<32x128xf32, #tpu.memory_space<vmem>>, %arg6: memref<1x128xf32, #tpu.memory_space<vmem>>, %arg7: memref<1x32xf32, #tpu.memory_space<vmem>>, %arg8: memref<1x1xf32, #tpu.memory_space<vmem>>, %arg9: memref<2x1xf32, #tpu.memory_space<vmem>>) attributes {dimension_semantics = [], scalar_prefetch = 0 : i64, scratch_operands = 0 : i64, tpu.core_type = #tpu.core_type<tc>} {
    %c0 = arith.constant 0 : index
    %c0_0 = arith.constant 0 : index
    %c0_1 = arith.constant 0 : index
    %0 = vector.load %arg0[%c0, %c0_0, %c0_1] : memref<2x8x4xf32, #tpu.memory_space<vmem>>, vector<2x8x4xf32>
    %1 = vector.extract_strided_slice %0 {offsets = [0, 0, 0], sizes = [2, 1, 4], strides = [1, 1, 1]} : vector<2x8x4xf32> to vector<2x1x4xf32>
    %2 = vector.shape_cast %1 : vector<2x1x4xf32> to vector<2x4xf32>
    %3 = vector.extract_strided_slice %0 {offsets = [0, 1, 0], sizes = [2, 1, 4], strides = [1, 1, 1]} : vector<2x8x4xf32> to vector<2x1x4xf32>
    %4 = vector.shape_cast %3 : vector<2x1x4xf32> to vector<2x4xf32>
    %5 = vector.extract_strided_slice %0 {offsets = [0, 2, 0], sizes = [2, 1, 4], strides = [1, 1, 1]} : vector<2x8x4xf32> to vector<2x1x4xf32>
    %6 = vector.shape_cast %5 : vector<2x1x4xf32> to vector<2x4xf32>
    %7 = vector.extract_strided_slice %0 {offsets = [0, 3, 0], sizes = [2, 1, 4], strides = [1, 1, 1]} : vector<2x8x4xf32> to vector<2x1x4xf32>
    %8 = vector.shape_cast %7 : vector<2x1x4xf32> to vector<2x4xf32>
    %9 = vector.extract_strided_slice %0 {offsets = [0, 4, 0], sizes = [2, 1, 4], strides = [1, 1, 1]} : vector<2x8x4xf32> to vector<2x1x4xf32>
    %10 = vector.shape_cast %9 : vector<2x1x4xf32> to vector<2x4xf32>
    %11 = vector.extract_strided_slice %0 {offsets = [0, 5, 0], sizes = [2, 1, 4], strides = [1, 1, 1]} : vector<2x8x4xf32> to vector<2x1x4xf32>
    %12 = vector.shape_cast %11 : vector<2x1x4xf32> to vector<2x4xf32>
    %13 = vector.extract_strided_slice %0 {offsets = [0, 6, 0], sizes = [2, 1, 4], strides = [1, 1, 1]} : vector<2x8x4xf32> to vector<2x1x4xf32>
    %14 = vector.shape_cast %13 : vector<2x1x4xf32> to vector<2x4xf32>
    %15 = vector.extract_strided_slice %0 {offsets = [0, 7, 0], sizes = [2, 1, 4], strides = [1, 1, 1]} : vector<2x8x4xf32> to vector<2x1x4xf32>
    %16 = vector.shape_cast %15 : vector<2x1x4xf32> to vector<2x4xf32>
    %17 = tpu.concatenate %2, %4, %6, %8, %10, %12, %14, %16 in 0 : vector<2x4xf32>, vector<2x4xf32>, vector<2x4xf32>, vector<2x4xf32>, vector<2x4xf32>, vector<2x4xf32>, vector<2x4xf32>, vector<2x4xf32> -> vector<16x4xf32>
    %c0_2 = arith.constant 0 : index
    %c0_3 = arith.constant 0 : index
    %18 = vector.load %arg1[%c0_2, %c0_3] : memref<4x128xf32, #tpu.memory_space<vmem>>, vector<4x128xf32>
    %c0_4 = arith.constant 0 : index
    %c0_5 = arith.constant 0 : index
    %19 = vector.load %arg2[%c0_4, %c0_5] : memref<32x128xf32, #tpu.memory_space<vmem>>, vector<32x128xf32>
    %c0_6 = arith.constant 0 : index
    %c0_7 = arith.constant 0 : index
    %20 = vector.load %arg3[%c0_6, %c0_7] : memref<1x128xf32, #tpu.memory_space<vmem>>, vector<1x128xf32>
    %cst = arith.constant dense<0.000000e+00> : vector<16x128xf32>
    %21 = tpu.matmul %17, %18, %cst {dimension_numbers = #tpu.dot_dimension_numbers<[1], [0], [0], [1], [0, 0, 1, 1], [], []>} : vector<16x4xf32>, vector<4x128xf32>, vector<16x128xf32> -> vector<16x128xf32>
    %22 = vector.broadcast %20 : vector<1x128xf32> to vector<16x128xf32>
    %23 = arith.addf %21, %22 : vector<16x128xf32>
    %cst_8 = arith.constant 0.000000e+00 : f32
    %24 = vector.broadcast %cst_8 : f32 to vector<2x32xf32>
    %cst_9 = arith.constant 0.000000e+00 : f32
    %25 = vector.broadcast %cst_9 : f32 to vector<2x32xf32>
    %26 = vector.extract_strided_slice %23 {offsets = [0, 0], sizes = [2, 128], strides = [1, 1]} : vector<16x128xf32> to vector<2x128xf32>
    %cst_10 = arith.constant dense<0.000000e+00> : vector<2x128xf32>
    %27 = tpu.matmul %24, %19, %cst_10 {dimension_numbers = #tpu.dot_dimension_numbers<[1], [0], [0], [1], [0, 0, 1, 1], [], []>} : vector<2x32xf32>, vector<32x128xf32>, vector<2x128xf32> -> vector<2x128xf32>
    %28 = arith.addf %26, %27 : vector<2x128xf32>
    %29 = arith.negf %28 : vector<2x128xf32>
    %30 = math.exp %29 : vector<2x128xf32>
    %cst_11 = arith.constant 1.000000e+00 : f32
    %31 = vector.broadcast %cst_11 : f32 to vector<2x128xf32>
    %32 = arith.addf %31, %30 : vector<2x128xf32>
    %33 = arith.divf %31, %32 : vector<2x128xf32>
    %34 = math.tanh %28 : vector<2x128xf32>
    %35 = vector.extract_strided_slice %33 {offsets = [0, 0], sizes = [2, 32], strides = [1, 1]} : vector<2x128xf32> to vector<2x32xf32>
    %36 = vector.extract_strided_slice %33 {offsets = [0, 32], sizes = [2, 32], strides = [1, 1]} : vector<2x128xf32> to vector<2x32xf32>
    %37 = vector.extract_strided_slice %34 {offsets = [0, 64], sizes = [2, 32], strides = [1, 1]} : vector<2x128xf32> to vector<2x32xf32>
    %38 = vector.extract_strided_slice %33 {offsets = [0, 96], sizes = [2, 32], strides = [1, 1]} : vector<2x128xf32> to vector<2x32xf32>
    %39 = arith.mulf %36, %25 : vector<2x32xf32>
    %40 = arith.mulf %35, %37 : vector<2x32xf32>
    %41 = arith.addf %39, %40 : vector<2x32xf32>
    %42 = math.tanh %41 : vector<2x32xf32>
    %43 = arith.mulf %38, %42 : vector<2x32xf32>
    %44 = vector.extract_strided_slice %23 {offsets = [2, 0], sizes = [2, 128], strides = [1, 1]} : vector<16x128xf32> to vector<2x128xf32>
    %cst_12 = arith.constant dense<0.000000e+00> : vector<2x128xf32>
    %45 = tpu.matmul %43, %19, %cst_12 {dimension_numbers = #tpu.dot_dimension_numbers<[1], [0], [0], [1], [0, 0, 1, 1], [], []>} : vector<2x32xf32>, vector<32x128xf32>, vector<2x128xf32> -> vector<2x128xf32>
    %46 = arith.addf %44, %45 : vector<2x128xf32>
    %47 = arith.negf %46 : vector<2x128xf32>
    %48 = math.exp %47 : vector<2x128xf32>
    %cst_13 = arith.constant 1.000000e+00 : f32
    %49 = vector.broadcast %cst_13 : f32 to vector<2x128xf32>
    %50 = arith.addf %49, %48 : vector<2x128xf32>
    %51 = arith.divf %49, %50 : vector<2x128xf32>
    %52 = math.tanh %46 : vector<2x128xf32>
    %53 = vector.extract_strided_slice %51 {offsets = [0, 0], sizes = [2, 32], strides = [1, 1]} : vector<2x128xf32> to vector<2x32xf32>
    %54 = vector.extract_strided_slice %51 {offsets = [0, 32], sizes = [2, 32], strides = [1, 1]} : vector<2x128xf32> to vector<2x32xf32>
    %55 = vector.extract_strided_slice %52 {offsets = [0, 64], sizes = [2, 32], strides = [1, 1]} : vector<2x128xf32> to vector<2x32xf32>
    %56 = vector.extract_strided_slice %51 {offsets = [0, 96], sizes = [2, 32], strides = [1, 1]} : vector<2x128xf32> to vector<2x32xf32>
    %57 = arith.mulf %54, %41 : vector<2x32xf32>
    %58 = arith.mulf %53, %55 : vector<2x32xf32>
    %59 = arith.addf %57, %58 : vector<2x32xf32>
    %60 = math.tanh %59 : vector<2x32xf32>
    %61 = arith.mulf %56, %60 : vector<2x32xf32>
    %62 = vector.extract_strided_slice %23 {offsets = [4, 0], sizes = [2, 128], strides = [1, 1]} : vector<16x128xf32> to vector<2x128xf32>
    %cst_14 = arith.constant dense<0.000000e+00> : vector<2x128xf32>
    %63 = tpu.matmul %61, %19, %cst_14 {dimension_numbers = #tpu.dot_dimension_numbers<[1], [0], [0], [1], [0, 0, 1, 1], [], []>} : vector<2x32xf32>, vector<32x128xf32>, vector<2x128xf32> -> vector<2x128xf32>
    %64 = arith.addf %62, %63 : vector<2x128xf32>
    %65 = arith.negf %64 : vector<2x128xf32>
    %66 = math.exp %65 : vector<2x128xf32>
    %cst_15 = arith.constant 1.000000e+00 : f32
    %67 = vector.broadcast %cst_15 : f32 to vector<2x128xf32>
    %68 = arith.addf %67, %66 : vector<2x128xf32>
    %69 = arith.divf %67, %68 : vector<2x128xf32>
    %70 = math.tanh %64 : vector<2x128xf32>
    %71 = vector.extract_strided_slice %69 {offsets = [0, 0], sizes = [2, 32], strides = [1, 1]} : vector<2x128xf32> to vector<2x32xf32>
    %72 = vector.extract_strided_slice %69 {offsets = [0, 32], sizes = [2, 32], strides = [1, 1]} : vector<2x128xf32> to vector<2x32xf32>
    %73 = vector.extract_strided_slice %70 {offsets = [0, 64], sizes = [2, 32], strides = [1, 1]} : vector<2x128xf32> to vector<2x32xf32>
    %74 = vector.extract_strided_slice %69 {offsets = [0, 96], sizes = [2, 32], strides = [1, 1]} : vector<2x128xf32> to vector<2x32xf32>
    %75 = arith.mulf %72, %59 : vector<2x32xf32>
    %76 = arith.mulf %71, %73 : vector<2x32xf32>
    %77 = arith.addf %75, %76 : vector<2x32xf32>
    %78 = math.tanh %77 : vector<2x32xf32>
    %79 = arith.mulf %74, %78 : vector<2x32xf32>
    %80 = vector.extract_strided_slice %23 {offsets = [6, 0], sizes = [2, 128], strides = [1, 1]} : vector<16x128xf32> to vector<2x128xf32>
    %cst_16 = arith.constant dense<0.000000e+00> : vector<2x128xf32>
    %81 = tpu.matmul %79, %19, %cst_16 {dimension_numbers = #tpu.dot_dimension_numbers<[1], [0], [0], [1], [0, 0, 1, 1], [], []>} : vector<2x32xf32>, vector<32x128xf32>, vector<2x128xf32> -> vector<2x128xf32>
    %82 = arith.addf %80, %81 : vector<2x128xf32>
    %83 = arith.negf %82 : vector<2x128xf32>
    %84 = math.exp %83 : vector<2x128xf32>
    %cst_17 = arith.constant 1.000000e+00 : f32
    %85 = vector.broadcast %cst_17 : f32 to vector<2x128xf32>
    %86 = arith.addf %85, %84 : vector<2x128xf32>
    %87 = arith.divf %85, %86 : vector<2x128xf32>
    %88 = math.tanh %82 : vector<2x128xf32>
    %89 = vector.extract_strided_slice %87 {offsets = [0, 0], sizes = [2, 32], strides = [1, 1]} : vector<2x128xf32> to vector<2x32xf32>
    %90 = vector.extract_strided_slice %87 {offsets = [0, 32], sizes = [2, 32], strides = [1, 1]} : vector<2x128xf32> to vector<2x32xf32>
    %91 = vector.extract_strided_slice %88 {offsets = [0, 64], sizes = [2, 32], strides = [1, 1]} : vector<2x128xf32> to vector<2x32xf32>
    %92 = vector.extract_strided_slice %87 {offsets = [0, 96], sizes = [2, 32], strides = [1, 1]} : vector<2x128xf32> to vector<2x32xf32>
    %93 = arith.mulf %90, %77 : vector<2x32xf32>
    %94 = arith.mulf %89, %91 : vector<2x32xf32>
    %95 = arith.addf %93, %94 : vector<2x32xf32>
    %96 = math.tanh %95 : vector<2x32xf32>
    %97 = arith.mulf %92, %96 : vector<2x32xf32>
    %98 = vector.extract_strided_slice %23 {offsets = [8, 0], sizes = [2, 128], strides = [1, 1]} : vector<16x128xf32> to vector<2x128xf32>
    %cst_18 = arith.constant dense<0.000000e+00> : vector<2x128xf32>
    %99 = tpu.matmul %97, %19, %cst_18 {dimension_numbers = #tpu.dot_dimension_numbers<[1], [0], [0], [1], [0, 0, 1, 1], [], []>} : vector<2x32xf32>, vector<32x128xf32>, vector<2x128xf32> -> vector<2x128xf32>
    %100 = arith.addf %98, %99 : vector<2x128xf32>
    %101 = arith.negf %100 : vector<2x128xf32>
    %102 = math.exp %101 : vector<2x128xf32>
    %cst_19 = arith.constant 1.000000e+00 : f32
    %103 = vector.broadcast %cst_19 : f32 to vector<2x128xf32>
    %104 = arith.addf %103, %102 : vector<2x128xf32>
    %105 = arith.divf %103, %104 : vector<2x128xf32>
    %106 = math.tanh %100 : vector<2x128xf32>
    %107 = vector.extract_strided_slice %105 {offsets = [0, 0], sizes = [2, 32], strides = [1, 1]} : vector<2x128xf32> to vector<2x32xf32>
    %108 = vector.extract_strided_slice %105 {offsets = [0, 32], sizes = [2, 32], strides = [1, 1]} : vector<2x128xf32> to vector<2x32xf32>
    %109 = vector.extract_strided_slice %106 {offsets = [0, 64], sizes = [2, 32], strides = [1, 1]} : vector<2x128xf32> to vector<2x32xf32>
    %110 = vector.extract_strided_slice %105 {offsets = [0, 96], sizes = [2, 32], strides = [1, 1]} : vector<2x128xf32> to vector<2x32xf32>
    %111 = arith.mulf %108, %95 : vector<2x32xf32>
    %112 = arith.mulf %107, %109 : vector<2x32xf32>
    %113 = arith.addf %111, %112 : vector<2x32xf32>
    %114 = math.tanh %113 : vector<2x32xf32>
    %115 = arith.mulf %110, %114 : vector<2x32xf32>
    %116 = vector.extract_strided_slice %23 {offsets = [10, 0], sizes = [2, 128], strides = [1, 1]} : vector<16x128xf32> to vector<2x128xf32>
    %cst_20 = arith.constant dense<0.000000e+00> : vector<2x128xf32>
    %117 = tpu.matmul %115, %19, %cst_20 {dimension_numbers = #tpu.dot_dimension_numbers<[1], [0], [0], [1], [0, 0, 1, 1], [], []>} : vector<2x32xf32>, vector<32x128xf32>, vector<2x128xf32> -> vector<2x128xf32>
    %118 = arith.addf %116, %117 : vector<2x128xf32>
    %119 = arith.negf %118 : vector<2x128xf32>
    %120 = math.exp %119 : vector<2x128xf32>
    %cst_21 = arith.constant 1.000000e+00 : f32
    %121 = vector.broadcast %cst_21 : f32 to vector<2x128xf32>
    %122 = arith.addf %121, %120 : vector<2x128xf32>
    %123 = arith.divf %121, %122 : vector<2x128xf32>
    %124 = math.tanh %118 : vector<2x128xf32>
    %125 = vector.extract_strided_slice %123 {offsets = [0, 0], sizes = [2, 32], strides = [1, 1]} : vector<2x128xf32> to vector<2x32xf32>
    %126 = vector.extract_strided_slice %123 {offsets = [0, 32], sizes = [2, 32], strides = [1, 1]} : vector<2x128xf32> to vector<2x32xf32>
    %127 = vector.extract_strided_slice %124 {offsets = [0, 64], sizes = [2, 32], strides = [1, 1]} : vector<2x128xf32> to vector<2x32xf32>
    %128 = vector.extract_strided_slice %123 {offsets = [0, 96], sizes = [2, 32], strides = [1, 1]} : vector<2x128xf32> to vector<2x32xf32>
    %129 = arith.mulf %126, %113 : vector<2x32xf32>
    %130 = arith.mulf %125, %127 : vector<2x32xf32>
    %131 = arith.addf %129, %130 : vector<2x32xf32>
    %132 = math.tanh %131 : vector<2x32xf32>
    %133 = arith.mulf %128, %132 : vector<2x32xf32>
    %134 = vector.extract_strided_slice %23 {offsets = [12, 0], sizes = [2, 128], strides = [1, 1]} : vector<16x128xf32> to vector<2x128xf32>
    %cst_22 = arith.constant dense<0.000000e+00> : vector<2x128xf32>
    %135 = tpu.matmul %133, %19, %cst_22 {dimension_numbers = #tpu.dot_dimension_numbers<[1], [0], [0], [1], [0, 0, 1, 1], [], []>} : vector<2x32xf32>, vector<32x128xf32>, vector<2x128xf32> -> vector<2x128xf32>
    %136 = arith.addf %134, %135 : vector<2x128xf32>
    %137 = arith.negf %136 : vector<2x128xf32>
    %138 = math.exp %137 : vector<2x128xf32>
    %cst_23 = arith.constant 1.000000e+00 : f32
    %139 = vector.broadcast %cst_23 : f32 to vector<2x128xf32>
    %140 = arith.addf %139, %138 : vector<2x128xf32>
    %141 = arith.divf %139, %140 : vector<2x128xf32>
    %142 = math.tanh %136 : vector<2x128xf32>
    %143 = vector.extract_strided_slice %141 {offsets = [0, 0], sizes = [2, 32], strides = [1, 1]} : vector<2x128xf32> to vector<2x32xf32>
    %144 = vector.extract_strided_slice %141 {offsets = [0, 32], sizes = [2, 32], strides = [1, 1]} : vector<2x128xf32> to vector<2x32xf32>
    %145 = vector.extract_strided_slice %142 {offsets = [0, 64], sizes = [2, 32], strides = [1, 1]} : vector<2x128xf32> to vector<2x32xf32>
    %146 = vector.extract_strided_slice %141 {offsets = [0, 96], sizes = [2, 32], strides = [1, 1]} : vector<2x128xf32> to vector<2x32xf32>
    %147 = arith.mulf %144, %131 : vector<2x32xf32>
    %148 = arith.mulf %143, %145 : vector<2x32xf32>
    %149 = arith.addf %147, %148 : vector<2x32xf32>
    %150 = math.tanh %149 : vector<2x32xf32>
    %151 = arith.mulf %146, %150 : vector<2x32xf32>
    %152 = vector.extract_strided_slice %23 {offsets = [14, 0], sizes = [2, 128], strides = [1, 1]} : vector<16x128xf32> to vector<2x128xf32>
    %cst_24 = arith.constant dense<0.000000e+00> : vector<2x128xf32>
    %153 = tpu.matmul %151, %19, %cst_24 {dimension_numbers = #tpu.dot_dimension_numbers<[1], [0], [0], [1], [0, 0, 1, 1], [], []>} : vector<2x32xf32>, vector<32x128xf32>, vector<2x128xf32> -> vector<2x128xf32>
    %154 = arith.addf %152, %153 : vector<2x128xf32>
    %155 = arith.negf %154 : vector<2x128xf32>
    %156 = math.exp %155 : vector<2x128xf32>
    %cst_25 = arith.constant 1.000000e+00 : f32
    %157 = vector.broadcast %cst_25 : f32 to vector<2x128xf32>
    %158 = arith.addf %157, %156 : vector<2x128xf32>
    %159 = arith.divf %157, %158 : vector<2x128xf32>
    %160 = math.tanh %154 : vector<2x128xf32>
    %161 = vector.extract_strided_slice %159 {offsets = [0, 0], sizes = [2, 32], strides = [1, 1]} : vector<2x128xf32> to vector<2x32xf32>
    %162 = vector.extract_strided_slice %159 {offsets = [0, 32], sizes = [2, 32], strides = [1, 1]} : vector<2x128xf32> to vector<2x32xf32>
    %163 = vector.extract_strided_slice %160 {offsets = [0, 64], sizes = [2, 32], strides = [1, 1]} : vector<2x128xf32> to vector<2x32xf32>
    %164 = vector.extract_strided_slice %159 {offsets = [0, 96], sizes = [2, 32], strides = [1, 1]} : vector<2x128xf32> to vector<2x32xf32>
    %165 = arith.mulf %162, %149 : vector<2x32xf32>
    %166 = arith.mulf %161, %163 : vector<2x32xf32>
    %167 = arith.addf %165, %166 : vector<2x32xf32>
    %168 = math.tanh %167 : vector<2x32xf32>
    %169 = arith.mulf %164, %168 : vector<2x32xf32>
    %170 = tpu.concatenate %43, %61, %79, %97, %115, %133, %151, %169 in 0 : vector<2x32xf32>, vector<2x32xf32>, vector<2x32xf32>, vector<2x32xf32>, vector<2x32xf32>, vector<2x32xf32>, vector<2x32xf32>, vector<2x32xf32> -> vector<16x32xf32>
    %c0_26 = arith.constant 0 : index
    %c0_27 = arith.constant 0 : index
    %171 = vector.load %arg4[%c0_26, %c0_27] : memref<32x128xf32, #tpu.memory_space<vmem>>, vector<32x128xf32>
    %c0_28 = arith.constant 0 : index
    %c0_29 = arith.constant 0 : index
    %172 = vector.load %arg5[%c0_28, %c0_29] : memref<32x128xf32, #tpu.memory_space<vmem>>, vector<32x128xf32>
    %c0_30 = arith.constant 0 : index
    %c0_31 = arith.constant 0 : index
    %173 = vector.load %arg6[%c0_30, %c0_31] : memref<1x128xf32, #tpu.memory_space<vmem>>, vector<1x128xf32>
    %cst_32 = arith.constant dense<0.000000e+00> : vector<16x128xf32>
    %174 = tpu.matmul %170, %171, %cst_32 {dimension_numbers = #tpu.dot_dimension_numbers<[1], [0], [0], [1], [0, 0, 1, 1], [], []>} : vector<16x32xf32>, vector<32x128xf32>, vector<16x128xf32> -> vector<16x128xf32>
    %175 = vector.broadcast %173 : vector<1x128xf32> to vector<16x128xf32>
    %176 = arith.addf %174, %175 : vector<16x128xf32>
    %cst_33 = arith.constant 0.000000e+00 : f32
    %177 = vector.broadcast %cst_33 : f32 to vector<2x32xf32>
    %cst_34 = arith.constant 0.000000e+00 : f32
    %178 = vector.broadcast %cst_34 : f32 to vector<2x32xf32>
    %179 = vector.extract_strided_slice %176 {offsets = [0, 0], sizes = [2, 128], strides = [1, 1]} : vector<16x128xf32> to vector<2x128xf32>
    %cst_35 = arith.constant dense<0.000000e+00> : vector<2x128xf32>
    %180 = tpu.matmul %177, %172, %cst_35 {dimension_numbers = #tpu.dot_dimension_numbers<[1], [0], [0], [1], [0, 0, 1, 1], [], []>} : vector<2x32xf32>, vector<32x128xf32>, vector<2x128xf32> -> vector<2x128xf32>
    %181 = arith.addf %179, %180 : vector<2x128xf32>
    %182 = arith.negf %181 : vector<2x128xf32>
    %183 = math.exp %182 : vector<2x128xf32>
    %cst_36 = arith.constant 1.000000e+00 : f32
    %184 = vector.broadcast %cst_36 : f32 to vector<2x128xf32>
    %185 = arith.addf %184, %183 : vector<2x128xf32>
    %186 = arith.divf %184, %185 : vector<2x128xf32>
    %187 = math.tanh %181 : vector<2x128xf32>
    %188 = vector.extract_strided_slice %186 {offsets = [0, 0], sizes = [2, 32], strides = [1, 1]} : vector<2x128xf32> to vector<2x32xf32>
    %189 = vector.extract_strided_slice %186 {offsets = [0, 32], sizes = [2, 32], strides = [1, 1]} : vector<2x128xf32> to vector<2x32xf32>
    %190 = vector.extract_strided_slice %187 {offsets = [0, 64], sizes = [2, 32], strides = [1, 1]} : vector<2x128xf32> to vector<2x32xf32>
    %191 = vector.extract_strided_slice %186 {offsets = [0, 96], sizes = [2, 32], strides = [1, 1]} : vector<2x128xf32> to vector<2x32xf32>
    %192 = arith.mulf %189, %178 : vector<2x32xf32>
    %193 = arith.mulf %188, %190 : vector<2x32xf32>
    %194 = arith.addf %192, %193 : vector<2x32xf32>
    %195 = math.tanh %194 : vector<2x32xf32>
    %196 = arith.mulf %191, %195 : vector<2x32xf32>
    %197 = vector.extract_strided_slice %176 {offsets = [2, 0], sizes = [2, 128], strides = [1, 1]} : vector<16x128xf32> to vector<2x128xf32>
    %cst_37 = arith.constant dense<0.000000e+00> : vector<2x128xf32>
    %198 = tpu.matmul %196, %172, %cst_37 {dimension_numbers = #tpu.dot_dimension_numbers<[1], [0], [0], [1], [0, 0, 1, 1], [], []>} : vector<2x32xf32>, vector<32x128xf32>, vector<2x128xf32> -> vector<2x128xf32>
    %199 = arith.addf %197, %198 : vector<2x128xf32>
    %200 = arith.negf %199 : vector<2x128xf32>
    %201 = math.exp %200 : vector<2x128xf32>
    %cst_38 = arith.constant 1.000000e+00 : f32
    %202 = vector.broadcast %cst_38 : f32 to vector<2x128xf32>
    %203 = arith.addf %202, %201 : vector<2x128xf32>
    %204 = arith.divf %202, %203 : vector<2x128xf32>
    %205 = math.tanh %199 : vector<2x128xf32>
    %206 = vector.extract_strided_slice %204 {offsets = [0, 0], sizes = [2, 32], strides = [1, 1]} : vector<2x128xf32> to vector<2x32xf32>
    %207 = vector.extract_strided_slice %204 {offsets = [0, 32], sizes = [2, 32], strides = [1, 1]} : vector<2x128xf32> to vector<2x32xf32>
    %208 = vector.extract_strided_slice %205 {offsets = [0, 64], sizes = [2, 32], strides = [1, 1]} : vector<2x128xf32> to vector<2x32xf32>
    %209 = vector.extract_strided_slice %204 {offsets = [0, 96], sizes = [2, 32], strides = [1, 1]} : vector<2x128xf32> to vector<2x32xf32>
    %210 = arith.mulf %207, %194 : vector<2x32xf32>
    %211 = arith.mulf %206, %208 : vector<2x32xf32>
    %212 = arith.addf %210, %211 : vector<2x32xf32>
    %213 = math.tanh %212 : vector<2x32xf32>
    %214 = arith.mulf %209, %213 : vector<2x32xf32>
    %215 = vector.extract_strided_slice %176 {offsets = [4, 0], sizes = [2, 128], strides = [1, 1]} : vector<16x128xf32> to vector<2x128xf32>
    %cst_39 = arith.constant dense<0.000000e+00> : vector<2x128xf32>
    %216 = tpu.matmul %214, %172, %cst_39 {dimension_numbers = #tpu.dot_dimension_numbers<[1], [0], [0], [1], [0, 0, 1, 1], [], []>} : vector<2x32xf32>, vector<32x128xf32>, vector<2x128xf32> -> vector<2x128xf32>
    %217 = arith.addf %215, %216 : vector<2x128xf32>
    %218 = arith.negf %217 : vector<2x128xf32>
    %219 = math.exp %218 : vector<2x128xf32>
    %cst_40 = arith.constant 1.000000e+00 : f32
    %220 = vector.broadcast %cst_40 : f32 to vector<2x128xf32>
    %221 = arith.addf %220, %219 : vector<2x128xf32>
    %222 = arith.divf %220, %221 : vector<2x128xf32>
    %223 = math.tanh %217 : vector<2x128xf32>
    %224 = vector.extract_strided_slice %222 {offsets = [0, 0], sizes = [2, 32], strides = [1, 1]} : vector<2x128xf32> to vector<2x32xf32>
    %225 = vector.extract_strided_slice %222 {offsets = [0, 32], sizes = [2, 32], strides = [1, 1]} : vector<2x128xf32> to vector<2x32xf32>
    %226 = vector.extract_strided_slice %223 {offsets = [0, 64], sizes = [2, 32], strides = [1, 1]} : vector<2x128xf32> to vector<2x32xf32>
    %227 = vector.extract_strided_slice %222 {offsets = [0, 96], sizes = [2, 32], strides = [1, 1]} : vector<2x128xf32> to vector<2x32xf32>
    %228 = arith.mulf %225, %212 : vector<2x32xf32>
    %229 = arith.mulf %224, %226 : vector<2x32xf32>
    %230 = arith.addf %228, %229 : vector<2x32xf32>
    %231 = math.tanh %230 : vector<2x32xf32>
    %232 = arith.mulf %227, %231 : vector<2x32xf32>
    %233 = vector.extract_strided_slice %176 {offsets = [6, 0], sizes = [2, 128], strides = [1, 1]} : vector<16x128xf32> to vector<2x128xf32>
    %cst_41 = arith.constant dense<0.000000e+00> : vector<2x128xf32>
    %234 = tpu.matmul %232, %172, %cst_41 {dimension_numbers = #tpu.dot_dimension_numbers<[1], [0], [0], [1], [0, 0, 1, 1], [], []>} : vector<2x32xf32>, vector<32x128xf32>, vector<2x128xf32> -> vector<2x128xf32>
    %235 = arith.addf %233, %234 : vector<2x128xf32>
    %236 = arith.negf %235 : vector<2x128xf32>
    %237 = math.exp %236 : vector<2x128xf32>
    %cst_42 = arith.constant 1.000000e+00 : f32
    %238 = vector.broadcast %cst_42 : f32 to vector<2x128xf32>
    %239 = arith.addf %238, %237 : vector<2x128xf32>
    %240 = arith.divf %238, %239 : vector<2x128xf32>
    %241 = math.tanh %235 : vector<2x128xf32>
    %242 = vector.extract_strided_slice %240 {offsets = [0, 0], sizes = [2, 32], strides = [1, 1]} : vector<2x128xf32> to vector<2x32xf32>
    %243 = vector.extract_strided_slice %240 {offsets = [0, 32], sizes = [2, 32], strides = [1, 1]} : vector<2x128xf32> to vector<2x32xf32>
    %244 = vector.extract_strided_slice %241 {offsets = [0, 64], sizes = [2, 32], strides = [1, 1]} : vector<2x128xf32> to vector<2x32xf32>
    %245 = vector.extract_strided_slice %240 {offsets = [0, 96], sizes = [2, 32], strides = [1, 1]} : vector<2x128xf32> to vector<2x32xf32>
    %246 = arith.mulf %243, %230 : vector<2x32xf32>
    %247 = arith.mulf %242, %244 : vector<2x32xf32>
    %248 = arith.addf %246, %247 : vector<2x32xf32>
    %249 = math.tanh %248 : vector<2x32xf32>
    %250 = arith.mulf %245, %249 : vector<2x32xf32>
    %251 = vector.extract_strided_slice %176 {offsets = [8, 0], sizes = [2, 128], strides = [1, 1]} : vector<16x128xf32> to vector<2x128xf32>
    %cst_43 = arith.constant dense<0.000000e+00> : vector<2x128xf32>
    %252 = tpu.matmul %250, %172, %cst_43 {dimension_numbers = #tpu.dot_dimension_numbers<[1], [0], [0], [1], [0, 0, 1, 1], [], []>} : vector<2x32xf32>, vector<32x128xf32>, vector<2x128xf32> -> vector<2x128xf32>
    %253 = arith.addf %251, %252 : vector<2x128xf32>
    %254 = arith.negf %253 : vector<2x128xf32>
    %255 = math.exp %254 : vector<2x128xf32>
    %cst_44 = arith.constant 1.000000e+00 : f32
    %256 = vector.broadcast %cst_44 : f32 to vector<2x128xf32>
    %257 = arith.addf %256, %255 : vector<2x128xf32>
    %258 = arith.divf %256, %257 : vector<2x128xf32>
    %259 = math.tanh %253 : vector<2x128xf32>
    %260 = vector.extract_strided_slice %258 {offsets = [0, 0], sizes = [2, 32], strides = [1, 1]} : vector<2x128xf32> to vector<2x32xf32>
    %261 = vector.extract_strided_slice %258 {offsets = [0, 32], sizes = [2, 32], strides = [1, 1]} : vector<2x128xf32> to vector<2x32xf32>
    %262 = vector.extract_strided_slice %259 {offsets = [0, 64], sizes = [2, 32], strides = [1, 1]} : vector<2x128xf32> to vector<2x32xf32>
    %263 = vector.extract_strided_slice %258 {offsets = [0, 96], sizes = [2, 32], strides = [1, 1]} : vector<2x128xf32> to vector<2x32xf32>
    %264 = arith.mulf %261, %248 : vector<2x32xf32>
    %265 = arith.mulf %260, %262 : vector<2x32xf32>
    %266 = arith.addf %264, %265 : vector<2x32xf32>
    %267 = math.tanh %266 : vector<2x32xf32>
    %268 = arith.mulf %263, %267 : vector<2x32xf32>
    %269 = vector.extract_strided_slice %176 {offsets = [10, 0], sizes = [2, 128], strides = [1, 1]} : vector<16x128xf32> to vector<2x128xf32>
    %cst_45 = arith.constant dense<0.000000e+00> : vector<2x128xf32>
    %270 = tpu.matmul %268, %172, %cst_45 {dimension_numbers = #tpu.dot_dimension_numbers<[1], [0], [0], [1], [0, 0, 1, 1], [], []>} : vector<2x32xf32>, vector<32x128xf32>, vector<2x128xf32> -> vector<2x128xf32>
    %271 = arith.addf %269, %270 : vector<2x128xf32>
    %272 = arith.negf %271 : vector<2x128xf32>
    %273 = math.exp %272 : vector<2x128xf32>
    %cst_46 = arith.constant 1.000000e+00 : f32
    %274 = vector.broadcast %cst_46 : f32 to vector<2x128xf32>
    %275 = arith.addf %274, %273 : vector<2x128xf32>
    %276 = arith.divf %274, %275 : vector<2x128xf32>
    %277 = math.tanh %271 : vector<2x128xf32>
    %278 = vector.extract_strided_slice %276 {offsets = [0, 0], sizes = [2, 32], strides = [1, 1]} : vector<2x128xf32> to vector<2x32xf32>
    %279 = vector.extract_strided_slice %276 {offsets = [0, 32], sizes = [2, 32], strides = [1, 1]} : vector<2x128xf32> to vector<2x32xf32>
    %280 = vector.extract_strided_slice %277 {offsets = [0, 64], sizes = [2, 32], strides = [1, 1]} : vector<2x128xf32> to vector<2x32xf32>
    %281 = vector.extract_strided_slice %276 {offsets = [0, 96], sizes = [2, 32], strides = [1, 1]} : vector<2x128xf32> to vector<2x32xf32>
    %282 = arith.mulf %279, %266 : vector<2x32xf32>
    %283 = arith.mulf %278, %280 : vector<2x32xf32>
    %284 = arith.addf %282, %283 : vector<2x32xf32>
    %285 = math.tanh %284 : vector<2x32xf32>
    %286 = arith.mulf %281, %285 : vector<2x32xf32>
    %287 = vector.extract_strided_slice %176 {offsets = [12, 0], sizes = [2, 128], strides = [1, 1]} : vector<16x128xf32> to vector<2x128xf32>
    %cst_47 = arith.constant dense<0.000000e+00> : vector<2x128xf32>
    %288 = tpu.matmul %286, %172, %cst_47 {dimension_numbers = #tpu.dot_dimension_numbers<[1], [0], [0], [1], [0, 0, 1, 1], [], []>} : vector<2x32xf32>, vector<32x128xf32>, vector<2x128xf32> -> vector<2x128xf32>
    %289 = arith.addf %287, %288 : vector<2x128xf32>
    %290 = arith.negf %289 : vector<2x128xf32>
    %291 = math.exp %290 : vector<2x128xf32>
    %cst_48 = arith.constant 1.000000e+00 : f32
    %292 = vector.broadcast %cst_48 : f32 to vector<2x128xf32>
    %293 = arith.addf %292, %291 : vector<2x128xf32>
    %294 = arith.divf %292, %293 : vector<2x128xf32>
    %295 = math.tanh %289 : vector<2x128xf32>
    %296 = vector.extract_strided_slice %294 {offsets = [0, 0], sizes = [2, 32], strides = [1, 1]} : vector<2x128xf32> to vector<2x32xf32>
    %297 = vector.extract_strided_slice %294 {offsets = [0, 32], sizes = [2, 32], strides = [1, 1]} : vector<2x128xf32> to vector<2x32xf32>
    %298 = vector.extract_strided_slice %295 {offsets = [0, 64], sizes = [2, 32], strides = [1, 1]} : vector<2x128xf32> to vector<2x32xf32>
    %299 = vector.extract_strided_slice %294 {offsets = [0, 96], sizes = [2, 32], strides = [1, 1]} : vector<2x128xf32> to vector<2x32xf32>
    %300 = arith.mulf %297, %284 : vector<2x32xf32>
    %301 = arith.mulf %296, %298 : vector<2x32xf32>
    %302 = arith.addf %300, %301 : vector<2x32xf32>
    %303 = math.tanh %302 : vector<2x32xf32>
    %304 = arith.mulf %299, %303 : vector<2x32xf32>
    %305 = vector.extract_strided_slice %176 {offsets = [14, 0], sizes = [2, 128], strides = [1, 1]} : vector<16x128xf32> to vector<2x128xf32>
    %cst_49 = arith.constant dense<0.000000e+00> : vector<2x128xf32>
    %306 = tpu.matmul %304, %172, %cst_49 {dimension_numbers = #tpu.dot_dimension_numbers<[1], [0], [0], [1], [0, 0, 1, 1], [], []>} : vector<2x32xf32>, vector<32x128xf32>, vector<2x128xf32> -> vector<2x128xf32>
    %307 = arith.addf %305, %306 : vector<2x128xf32>
    %308 = arith.negf %307 : vector<2x128xf32>
    %309 = math.exp %308 : vector<2x128xf32>
    %cst_50 = arith.constant 1.000000e+00 : f32
    %310 = vector.broadcast %cst_50 : f32 to vector<2x128xf32>
    %311 = arith.addf %310, %309 : vector<2x128xf32>
    %312 = arith.divf %310, %311 : vector<2x128xf32>
    %313 = math.tanh %307 : vector<2x128xf32>
    %314 = vector.extract_strided_slice %312 {offsets = [0, 0], sizes = [2, 32], strides = [1, 1]} : vector<2x128xf32> to vector<2x32xf32>
    %315 = vector.extract_strided_slice %312 {offsets = [0, 32], sizes = [2, 32], strides = [1, 1]} : vector<2x128xf32> to vector<2x32xf32>
    %316 = vector.extract_strided_slice %313 {offsets = [0, 64], sizes = [2, 32], strides = [1, 1]} : vector<2x128xf32> to vector<2x32xf32>
    %317 = vector.extract_strided_slice %312 {offsets = [0, 96], sizes = [2, 32], strides = [1, 1]} : vector<2x128xf32> to vector<2x32xf32>
    %318 = arith.mulf %315, %302 : vector<2x32xf32>
    %319 = arith.mulf %314, %316 : vector<2x32xf32>
    %320 = arith.addf %318, %319 : vector<2x32xf32>
    %321 = math.tanh %320 : vector<2x32xf32>
    %322 = arith.mulf %317, %321 : vector<2x32xf32>
    %c0_51 = arith.constant 0 : index
    %c0_52 = arith.constant 0 : index
    %323 = vector.load %arg7[%c0_51, %c0_52] : memref<1x32xf32, #tpu.memory_space<vmem>>, vector<1x32xf32>
    %324 = vector.broadcast %323 : vector<1x32xf32> to vector<2x32xf32>
    %325 = arith.mulf %322, %324 : vector<2x32xf32>
    %cst_53 = arith.constant dense<0.000000e+00> : vector<2xf32>
    %326 = vector.multi_reduction <add>, %325, %cst_53 [1] : vector<2x32xf32> to vector<2xf32>
    %327 = vector.shape_cast %326 : vector<2xf32> to vector<2x1xf32>
    %c0_54 = arith.constant 0 : index
    %c0_55 = arith.constant 0 : index
    %328 = vector.load %arg8[%c0_54, %c0_55] : memref<1x1xf32, #tpu.memory_space<vmem>>, vector<1x1xf32>
    %329 = vector.broadcast %328 : vector<1x1xf32> to vector<2x1xf32>
    %330 = arith.addf %327, %329 : vector<2x1xf32>
    %c0_56 = arith.constant 0 : index
    %c0_57 = arith.constant 0 : index
    %331 = vector.load %arg9[%c0_56, %c0_57] : memref<2x1xf32, #tpu.memory_space<vmem>>, vector<2x1xf32>
    tpu.vector_store %arg9[%c0_56, %c0_57], %330 {strides = array<i32>} : memref<2x1xf32, #tpu.memory_space<vmem>>, vector<2x1xf32>,
    return
  }
}

</mosaic_0001>

<llo_original>
// kernel: tpu_custom_call.1
$region0: #{tpu_custom_call.1}
  #allocation0 [shape = 'u32[]', space=smem, size = 0x4, offset = 0x4, fixed_abs, tag = 'smem constant byte address 0x4 - core index']
  #allocation1 [shape = 'u32[144,128]{1,0:T(1,128)}', space=vmem, size = 0x12000, scoped, tag = 'internal scratch']
  #allocation2 [shape = 'f32[1,1]{1,0:T(1,128)S(1)}', space=vmem, size = 0x200, scoped, tag = 'scoped memory for tpu_custom_call.1']
  %s0 = inlined_call_operand.vmem [shape: f32[2,8,4], index: 0, kind: input, shape index: {}]
  %s1 = inlined_call_operand.hbm [shape: f32[4,128], index: 1, kind: input, shape index: {}]
  %s2 = inlined_call_operand.vmem [shape: f32[32,128], index: 2, kind: input, shape index: {}]
  %s3 = inlined_call_operand.vmem [shape: f32[1,128], index: 3, kind: input, shape index: {}]
  %s4 = inlined_call_operand.hbm [shape: f32[32,128], index: 4, kind: input, shape index: {}]
  %s5 = inlined_call_operand.hbm [shape: f32[32,128], index: 5, kind: input, shape index: {}]
  %s6 = inlined_call_operand.vmem [shape: f32[1,128], index: 6, kind: input, shape index: {}]
  %s7 = inlined_call_operand.vmem [shape: f32[1,32], index: 7, kind: input, shape index: {}]
  %s8 = inlined_call_operand.<no memory space> [shape: f32[1,1], index: 8, kind: input, shape index: {}]
  %s9 = inlined_call_operand.vmem [shape: f32[2,1], index: 9, kind: output, shape index: {}]
  %s10 = sld [smem:[#allocation0]]
  $region58: #{tpu_custom_call.1} parent=0
    _
  %s12 = ssub.s32 1, %s10
  %s13 = scalar_select 0, %s12, %s10
  %v14 = vstv %s8
  %15 = vst [vmem:[#allocation2] sm:$0x1] %v14
  $region1: #{tpu_custom_call.1} parent=0
    #allocation3 [shape = 'u8[2048]{0}', space=vmem, size = 0x800, scoped, tag = 'input window, operand 1, single buffered']
    #allocation4 [shape = 's32[1]{0}', space=sflag, size = 0x4, scoped, tag = 'scoped memory for tpu_custom_call.1']
    #allocation5 [shape = 'u8[16384]{0}', space=vmem, size = 0x4000, scoped, tag = 'input window, operand 4, single buffered']
    #allocation6 [shape = 's32[1]{0}', space=sflag, size = 0x4, scoped, tag = 'scoped memory for tpu_custom_call.1']
    #allocation7 [shape = 'u8[16384]{0}', space=vmem, size = 0x4000, scoped, tag = 'input window, operand 5, single buffered']
    %16 = vsyncpa [#allocation4], 0
    %17 = vsyncpa [#allocation6], 0
    // Predicated region
    $region2: #{tpu_custom_call.1} parent=1 // pred_check
      _
    $region3: #{tpu_custom_call.1} parent=1 // pred_check_branch
      %19 = sbr.rel (0) target = $region5
    $region4: #{tpu_custom_call.1} parent=1 // pred_region
      _
    $region5: #{tpu_custom_call.1} parent=1 // pred_fallthru
      _
    // Predicated region
    $region6: #{tpu_custom_call.1} parent=1 // pred_check
      _
    $region7: #{tpu_custom_call.1} parent=1 // pred_check_branch
      %21 = sbr.rel (0) target = $region9
    $region8: #{tpu_custom_call.1} parent=1 // pred_region
      %s23 = ssub.s32 64, 64
      %24 = vsyncadd [#allocation4], %s23
      %s26 = sshll.u32 [#allocation3], 4
      %s27 = int_to_ptr.vmem [resolvable:$true] %s26
      %29 = dma.hbm_to_vmem [thread:$0]  %s1, 64, %s27, [#allocation4]
    $region9: #{tpu_custom_call.1} parent=1 // pred_fallthru
      _
    // Predicated region
    $region10: #{tpu_custom_call.1} parent=1 // pred_check
      _
    $region11: #{tpu_custom_call.1} parent=1 // pred_check_branch
      %31 = sbr.rel (0) target = $region13
    $region12: #{tpu_custom_call.1} parent=1 // pred_region
      _
    $region13: #{tpu_custom_call.1} parent=1 // pred_fallthru
      _
    // Predicated region
    $region14: #{tpu_custom_call.1} parent=1 // pred_check
      _
    $region15: #{tpu_custom_call.1} parent=1 // pred_check_branch
      %33 = sbr.rel (0) target = $region17
    $region16: #{tpu_custom_call.1} parent=1 // pred_region
      _
    $region17: #{tpu_custom_call.1} parent=1 // pred_fallthru
      _
    // Predicated region
    $region18: #{tpu_custom_call.1} parent=1 // pred_check
      _
    $region19: #{tpu_custom_call.1} parent=1 // pred_check_branch
      %35 = sbr.rel (0) target = $region21
    $region20: #{tpu_custom_call.1} parent=1 // pred_region
      %s37 = ssub.s32 512, 512
      %38 = vsyncadd [#allocation6], %s37
      %s39 = sshll.u32 [#allocation5], 4
      %s40 = int_to_ptr.vmem [resolvable:$true] %s39
      %45 = dma.hbm_to_vmem [thread:$0]  %s4, 512, %s40, [#allocation6], 128, 128, 8
    $region21: #{tpu_custom_call.1} parent=1 // pred_fallthru
      _
    // Predicated region
    $region22: #{tpu_custom_call.1} parent=1 // pred_check
      _
    $region23: #{tpu_custom_call.1} parent=1 // pred_check_branch
      %47 = sbr.rel (0) target = $region25
    $region24: #{tpu_custom_call.1} parent=1 // pred_region
      %s49 = ssub.s32 512, 512
      %50 = vsyncadd [#allocation6], %s49
      %s51 = sshll.u32 [#allocation7], 4
      %s52 = int_to_ptr.vmem [resolvable:$true] %s51
      %57 = dma.hbm_to_vmem [thread:$0]  %s5, 512, %s52, [#allocation6], 128, 128, 8
    $region25: #{tpu_custom_call.1} parent=1 // pred_fallthru
      _
    // Predicated region
    $region26: #{tpu_custom_call.1} parent=1 // pred_check
      _
    $region27: #{tpu_custom_call.1} parent=1 // pred_check_branch
      %59 = sbr.rel (0) target = $region29
    $region28: #{tpu_custom_call.1} parent=1 // pred_region
      _
    $region29: #{tpu_custom_call.1} parent=1 // pred_fallthru
      _
    // Predicated region
    $region30: #{tpu_custom_call.1} parent=1 // pred_check
      _
    $region31: #{tpu_custom_call.1} parent=1 // pred_check_branch
      %61 = sbr.rel (0) target = $region33
    $region32: #{tpu_custom_call.1} parent=1 // pred_region
      _
    $region33: #{tpu_custom_call.1} parent=1 // pred_fallthru
      _
    // Predicated region
    $region34: #{tpu_custom_call.1} parent=1 // pred_check
      _
    $region35: #{tpu_custom_call.1} parent=1 // pred_check_branch
      %63 = sbr.rel (0) target = $region37
    $region36: #{tpu_custom_call.1} parent=1 // pred_region
      _
    $region37: #{tpu_custom_call.1} parent=1 // pred_fallthru
      _
    // Predicated region
    $region38: #{tpu_custom_call.1} parent=1 // pred_check
      _
    $region39: #{tpu_custom_call.1} parent=1 // pred_check_branch
      %65 = sbr.rel (0) target = $region41
    $region40: #{tpu_custom_call.1} parent=1 // pred_region
      %66 = dma.done [#allocation4], 64
    $region41: #{tpu_custom_call.1} parent=1 // pred_fallthru
      _
    // Predicated region
    $region42: #{tpu_custom_call.1} parent=1 // pred_check
      _
    $region43: #{tpu_custom_call.1} parent=1 // pred_check_branch
      %68 = sbr.rel (0) target = $region45
    $region44: #{tpu_custom_call.1} parent=1 // pred_region
      %69 = dma.done [#allocation6], 512
    $region45: #{tpu_custom_call.1} parent=1 // pred_fallthru
      _
    // Predicated region
    $region46: #{tpu_custom_call.1} parent=1 // pred_check
      _
    $region47: #{tpu_custom_call.1} parent=1 // pred_check_branch
      %71 = sbr.rel (0) target = $region49
    $region48: #{tpu_custom_call.1} parent=1 // pred_region
      %72 = dma.done [#allocation6], 512
    $region49: #{tpu_custom_call.1} parent=1 // pred_fallthru
      _
    %v73 = vld [vmem:[%s0] sm:$0xff]
    %v74 = vld [vmem:[%s0 + $0x8] sm:$0xff]
    %v77 = vrot.slane %v74, 7
    %vm78 = vcmask 1041409
    %v79 = vsel %vm78, %v77, %v73
    %v81 = vrot.slane %v73, 7
    %v82 = vrot.slane %v74, 6
    %vm83 = vcmask 1043459
    %v84 = vsel %vm83, %v82, %v81
    %v86 = vrot.slane %v73, 6
    %v87 = vrot.slane %v74, 5
    %vm88 = vcmask 1045509
    %v89 = vsel %vm88, %v87, %v86
    %v91 = vrot.slane %v73, 5
    %v92 = vrot.slane %v74, 4
    %vm93 = vcmask 1047559
    %v94 = vsel %vm93, %v92, %v91
    %v96 = vrot.slane %v73, 4
    %v97 = vrot.slane %v74, 3
    %v98 = vsel %vm78, %v97, %v96
    %v100 = vrot.slane %v73, 3
    %v101 = vrot.slane %v74, 2
    %v102 = vsel %vm83, %v101, %v100
    %v104 = vrot.slane %v73, 2
    %v105 = vrot.slane %v74, 1
    %v106 = vsel %vm88, %v105, %v104
    %v108 = vrot.slane %v73, 1
    %v109 = vsel %vm93, %v74, %v108
    %vm111 = vcmask 1041408
    %v112 = vsel %vm111, %v79, %v84
    %vm113 = vcmask 1043456
    %v114 = vsel %vm113, %v112, %v89
    %vm115 = vcmask 1045504
    %v116 = vsel %vm115, %v114, %v94
    %v117 = vsel %vm111, %v98, %v102
    %v118 = vsel %vm113, %v117, %v106
    %v119 = vsel %vm115, %v118, %v109
    %v120 = vld [vmem:[#allocation3] sm:$0xf]
    %v121 = vld [vmem:[%s2] sm:$0xff]
    %v122 = vld [vmem:[%s2 + $0x8] sm:$0xff]
    %v123 = vld [vmem:[%s2 + $0x10] sm:$0xff]
    %v124 = vld [vmem:[%s2 + $0x18] sm:$0xff]
    %v125 = vld [vmem:[%s3] sm:$0x1]
    %v127 = vlaneseq
    %v128 = vshrl.u32 %v127, 7
    %v129 = vsub.s32 0, %v128
    %v130 = vrot.slane %v125, %v129
    %vm132 = vcmask 31744
    %v134 = vsel %vm132, %v116, 0
    %v137 = vsel %vm132, %v119, 0
    %v140 = vsel %vm113, %v120, 0
    %142 = vmatprep.subr.mxu0 0.0
    %143 = vmatpush1.msra.mxu0 %v140
    %144 = vmatprep.subr.mxu0 0.0
    %145 = vmatpush1.msra.mxu0 0.0
    %146 = vmatprep.subr.mxu0 0.0
    %147 = vmatpush1.msra.mxu0 0.0
    %148 = vmatprep.subr.mxu0 0.0
    %149 = vmatpush1.msra.mxu0 0.0
    %150 = vmatprep.subr.mxu0 0.0
    %151 = vmatpush1.msra.mxu0 0.0
    %152 = vmatprep.subr.mxu0 0.0
    %153 = vmatpush1.msra.mxu0 0.0
    %154 = vmatprep.subr.mxu0 0.0
    %155 = vmatpush1.msra.mxu0 0.0
    %156 = vmatprep.subr.mxu0 0.0
    %157 = vmatpush1.msra.mxu0 0.0
    %158 = vmatprep.subr.mxu0 0.0
    %159 = vmatpush1.msra.mxu0 0.0
    %160 = vmatprep.subr.mxu0 0.0
    %161 = vmatpush1.msra.mxu0 0.0
    %162 = vmatprep.subr.mxu0 0.0
    %163 = vmatpush1.msra.mxu0 0.0
    %164 = vmatprep.subr.mxu0 0.0
    %165 = vmatpush1.msra.mxu0 0.0
    %166 = vmatprep.subr.mxu0 0.0
    %167 = vmatpush1.msra.mxu0 0.0
    %168 = vmatprep.subr.mxu0 0.0
    %169 = vmatpush1.msra.mxu0 0.0
    %170 = vmatprep.subr.mxu0 0.0
    %171 = vmatpush1.msra.mxu0 0.0
    %172 = vmatprep.subr.mxu0 0.0
    %173 = vmatpush1.msra.mxu0 0.0
    %174 = vmatprep.subr.mxu0 0.0
    %175 = vmatpush1.msra.mxu0 0.0
    %176 = vmatprep.subr.mxu0 0.0
    %177 = vmatpush1.msra.mxu0 0.0
    %178 = vmatprep.subr.mxu0 0.0
    %179 = vmatpush1.msra.mxu0 0.0
    %180 = vmatprep.subr.mxu0 0.0
    %181 = vmatpush1.msra.mxu0 0.0
    %182 = vmatprep.subr.mxu0 0.0
    %183 = vmatpush1.msra.mxu0 0.0
    %184 = vmatprep.subr.mxu0 0.0
    %185 = vmatpush1.msra.mxu0 0.0
    %186 = vmatprep.subr.mxu0 0.0
    %187 = vmatpush1.msra.mxu0 0.0
    %188 = vmatprep.subr.mxu0 0.0
    %189 = vmatpush1.msra.mxu0 0.0
    %190 = vmatprep.subr.mxu0 0.0
    %191 = vmatpush1.msra.mxu0 0.0
    %192 = vmatprep.subr.mxu0 0.0
    %193 = vmatpush1.msra.mxu0 0.0
    %194 = vmatprep.subr.mxu0 0.0
    %195 = vmatpush1.msra.mxu0 0.0
    %196 = vmatprep.subr.mxu0 0.0
    %197 = vmatpush1.msra.mxu0 0.0
    %198 = vmatprep.subr.mxu0 0.0
    %199 = vmatpush1.msra.mxu0 0.0
    %200 = vmatprep.subr.mxu0 0.0
    %201 = vmatpush1.msra.mxu0 0.0
    %202 = vmatprep.subr.mxu0 0.0
    %203 = vmatpush1.msra.mxu0 0.0
    %204 = vmatprep.subr.mxu0 0.0
    %205 = vmatpush1.msra.mxu0 0.0
    %206 = vmatprep.mubr.f32.mxu0 0.0
    %207 = vmatmul.mubr.f32.gmra.mrb[0].mxu0 %v134
    %v208 = vpop.f32.mrb[0].mxu0
    %v209 = vadd.f32 %v130, %v208
    %v210 = vpop.f32.mrb[0].mxu0
    %211 = vmatprep.mubr.f32.mxu0 0.0
    %212 = vmatmul.mubr.f32.gmra.mrb[0].mxu0 %v137
    %v213 = vpop.f32.mrb[0].mxu0
    %v214 = vadd.f32 %v130, %v213
    %v215 = vpop.f32.mrb[0].mxu0
    %216 = vdwg.mxu0
    %vm217 = vcmask 261120
    %v219 = vsel %vm217, 0.0, 0
    %221 = vmatprep.subr.mxu0 0.0
    %222 = vmatpush1.msra.mxu0 %v121
    %223 = vmatprep.subr.mxu0 0.0
    %224 = vmatpush1.msra.mxu0 %v122
    %225 = vmatprep.subr.mxu0 0.0
    %226 = vmatpush1.msra.mxu0 %v123
    %227 = vmatprep.subr.mxu0 0.0
    %228 = vmatpush1.msra.mxu0 %v124
    %229 = vmatprep.subr.mxu0 0.0
    %230 = vmatpush1.msra.mxu0 0.0
    %231 = vmatprep.subr.mxu0 0.0
    %232 = vmatpush1.msra.mxu0 0.0
    %233 = vmatprep.subr.mxu0 0.0
    %234 = vmatpush1.msra.mxu0 0.0
    %235 = vmatprep.subr.mxu0 0.0
    %236 = vmatpush1.msra.mxu0 0.0
    %237 = vmatprep.subr.mxu0 0.0
    %238 = vmatpush1.msra.mxu0 0.0
    %239 = vmatprep.subr.mxu0 0.0
    %240 = vmatpush1.msra.mxu0 0.0
    %241 = vmatprep.subr.mxu0 0.0
    %242 = vmatpush1.msra.mxu0 0.0
    %243 = vmatprep.subr.mxu0 0.0
    %244 = vmatpush1.msra.mxu0 0.0
    %245 = vmatprep.subr.mxu0 0.0
    %246 = vmatpush1.msra.mxu0 0.0
    %247 = vmatprep.subr.mxu0 0.0
    %248 = vmatpush1.msra.mxu0 0.0
    %249 = vmatprep.subr.mxu0 0.0
    %250 = vmatpush1.msra.mxu0 0.0
    %251 = vmatprep.subr.mxu0 0.0
    %252 = vmatpush1.msra.mxu0 0.0
    %253 = vmatprep.subr.mxu0 0.0
    %254 = vmatpush1.msra.mxu0 0.0
    %255 = vmatprep.subr.mxu0 0.0
    %256 = vmatpush1.msra.mxu0 0.0
    %257 = vmatprep.subr.mxu0 0.0
    %258 = vmatpush1.msra.mxu0 0.0
    %259 = vmatprep.subr.mxu0 0.0
    %260 = vmatpush1.msra.mxu0 0.0
    %261 = vmatprep.subr.mxu0 0.0
    %262 = vmatpush1.msra.mxu0 0.0
    %263 = vmatprep.subr.mxu0 0.0
    %264 = vmatpush1.msra.mxu0 0.0
    %265 = vmatprep.subr.mxu0 0.0
    %266 = vmatpush1.msra.mxu0 0.0
    %267 = vmatprep.subr.mxu0 0.0
    %268 = vmatpush1.msra.mxu0 0.0
    %269 = vmatprep.subr.mxu0 0.0
    %270 = vmatpush1.msra.mxu0 0.0
    %271 = vmatprep.subr.mxu0 0.0
    %272 = vmatpush1.msra.mxu0 0.0
    %273 = vmatprep.subr.mxu0 0.0
    %274 = vmatpush1.msra.mxu0 0.0
    %275 = vmatprep.subr.mxu0 0.0
    %276 = vmatpush1.msra.mxu0 0.0
    %277 = vmatprep.subr.mxu0 0.0
    %278 = vmatpush1.msra.mxu0 0.0
    %279 = vmatprep.subr.mxu0 0.0
    %280 = vmatpush1.msra.mxu0 0.0
    %281 = vmatprep.subr.mxu0 0.0
    %282 = vmatpush1.msra.mxu0 0.0
    %283 = vmatprep.subr.mxu0 0.0
    %284 = vmatpush1.msra.mxu0 0.0
    %285 = vmatprep.mubr.f32.mxu0 0.0
    %286 = vmatmul.mubr.f32.gmra.mrb[0].mxu0 %v219
    %v287 = vpop.f32.mrb[0].mxu0
    %v288 = vadd.f32 0.0, %v287
    %v289 = vpop.f32.mrb[0].mxu0
    %290 = vdwg.mxu0
    %v291 = vadd.f32 %v209, %v288
    %v292 = vxor.u32 %v291, 2147483648
    %v293 = vmul.f32 %v292, 1.442695
    %v294 = vpow.pop %v293
    %v295 = vadd.f32 %v294, 1.0
    %v296 = vrcp.pop %v295
    %v297 = vmul.f32 1.0, %v296
    %v298 = vtanh.pop %v291
    %v299 = vmul.f32 %v297, 0.0
    %301 = vrot.lane.b32.xlu0 %v298, 64
    %v302 = vpop.permute.xlu0 %301
    %v304 = vmul.f32 %v297, %v302
    %306 = vrot.lane.b32.xlu0 %v304, 32
    %v307 = vpop.permute.xlu0 %306
    %v309 = vadd.f32 %v299, %v307
    %v310 = vtanh.pop %v309
    %312 = vrot.lane.b32.xlu0 %v310, 64
    %v313 = vpop.permute.xlu0 %312
    %v315 = vmul.f32 %v297, %v313
    %317 = vrot.lane.b32.xlu0 %v315, 32
    %v318 = vpop.permute.xlu0 %317
    %v319 = vsel %vm217, %v318, 0
    %321 = vmatprep.subr.mxu0 0.0
    %322 = vmatpush1.msra.mxu0 %v121
    %323 = vmatprep.subr.mxu0 0.0
    %324 = vmatpush1.msra.mxu0 %v122
    %325 = vmatprep.subr.mxu0 0.0
    %326 = vmatpush1.msra.mxu0 %v123
    %327 = vmatprep.subr.mxu0 0.0
    %328 = vmatpush1.msra.mxu0 %v124
    %329 = vmatprep.subr.mxu0 0.0
    %330 = vmatpush1.msra.mxu0 0.0
    %331 = vmatprep.subr.mxu0 0.0
    %332 = vmatpush1.msra.mxu0 0.0
    %333 = vmatprep.subr.mxu0 0.0
    %334 = vmatpush1.msra.mxu0 0.0
    %335 = vmatprep.subr.mxu0 0.0
    %336 = vmatpush1.msra.mxu0 0.0
    %337 = vmatprep.subr.mxu0 0.0
    %338 = vmatpush1.msra.mxu0 0.0
    %339 = vmatprep.subr.mxu0 0.0
    %340 = vmatpush1.msra.mxu0 0.0
    %341 = vmatprep.subr.mxu0 0.0
    %342 = vmatpush1.msra.mxu0 0.0
    %343 = vmatprep.subr.mxu0 0.0
    %344 = vmatpush1.msra.mxu0 0.0
    %345 = vmatprep.subr.mxu0 0.0
    %346 = vmatpush1.msra.mxu0 0.0
    %347 = vmatprep.subr.mxu0 0.0
    %348 = vmatpush1.msra.mxu0 0.0
    %349 = vmatprep.subr.mxu0 0.0
    %350 = vmatpush1.msra.mxu0 0.0
    %351 = vmatprep.subr.mxu0 0.0
    %352 = vmatpush1.msra.mxu0 0.0
    %353 = vmatprep.subr.mxu0 0.0
    %354 = vmatpush1.msra.mxu0 0.0
    %355 = vmatprep.subr.mxu0 0.0
    %356 = vmatpush1.msra.mxu0 0.0
    %357 = vmatprep.subr.mxu0 0.0
    %358 = vmatpush1.msra.mxu0 0.0
    %359 = vmatprep.subr.mxu0 0.0
    %360 = vmatpush1.msra.mxu0 0.0
    %361 = vmatprep.subr.mxu0 0.0
    %362 = vmatpush1.msra.mxu0 0.0
    %363 = vmatprep.subr.mxu0 0.0
    %364 = vmatpush1.msra.mxu0 0.0
    %365 = vmatprep.subr.mxu0 0.0
    %366 = vmatpush1.msra.mxu0 0.0
    %367 = vmatprep.subr.mxu0 0.0
    %368 = vmatpush1.msra.mxu0 0.0
    %369 = vmatprep.subr.mxu0 0.0
    %370 = vmatpush1.msra.mxu0 0.0
    %371 = vmatprep.subr.mxu0 0.0
    %372 = vmatpush1.msra.mxu0 0.0
    %373 = vmatprep.subr.mxu0 0.0
    %374 = vmatpush1.msra.mxu0 0.0
    %375 = vmatprep.subr.mxu0 0.0
    %376 = vmatpush1.msra.mxu0 0.0
    %377 = vmatprep.subr.mxu0 0.0
    %378 = vmatpush1.msra.mxu0 0.0
    %379 = vmatprep.subr.mxu0 0.0
    %380 = vmatpush1.msra.mxu0 0.0
    %381 = vmatprep.subr.mxu0 0.0
    %382 = vmatpush1.msra.mxu0 0.0
    %383 = vmatprep.subr.mxu0 0.0
    %384 = vmatpush1.msra.mxu0 0.0
    %385 = vmatprep.mubr.f32.mxu0 0.0
    %386 = vmatmul.mubr.f32.gmra.mrb[0].mxu0 %v319
    %v387 = vpop.f32.mrb[0].mxu0
    %v388 = vadd.f32 0.0, %v387
    %v389 = vpop.f32.mrb[0].mxu0
    %390 = vdwg.mxu0
    %v392 = vrot.slane %v388, 6
    %v394 = vadd.f32 %v209, %v392
    %v395 = vxor.u32 %v394, 2147483648
    %v396 = vmul.f32 %v395, 1.442695
    %v397 = vpow.pop %v396
    %v398 = vadd.f32 %v397, 1.0
    %v399 = vrcp.pop %v398
    %v400 = vmul.f32 1.0, %v399
    %v401 = vtanh.pop %v394
    %v403 = vrot.slane %v309, 6
    %v405 = vmul.f32 %v400, %v403
    %407 = vrot.lane.b32.xlu0 %v401, 64
    %v408 = vpop.permute.xlu0 %407
    %v410 = vmul.f32 %v400, %v408
    %412 = vrot.lane.b32.xlu0 %v410, 32
    %v413 = vpop.permute.xlu0 %412
    %v415 = vadd.f32 %v405, %v413
    %v416 = vtanh.pop %v415
    %418 = vrot.lane.b32.xlu0 %v416, 64
    %v419 = vpop.permute.xlu0 %418
    %v421 = vmul.f32 %v400, %v419
    %v423 = vrot.slane %v421, 2
    %424 = vrot.lane.b32.xlu0 %v423, 32
    %v425 = vpop.permute.xlu0 %424
    %v426 = vsel %vm217, %v425, 0
    %428 = vmatprep.subr.mxu0 0.0
    %429 = vmatpush1.msra.mxu0 %v121
    %430 = vmatprep.subr.mxu0 0.0
    %431 = vmatpush1.msra.mxu0 %v122
    %432 = vmatprep.subr.mxu0 0.0
    %433 = vmatpush1.msra.mxu0 %v123
    %434 = vmatprep.subr.mxu0 0.0
    %435 = vmatpush1.msra.mxu0 %v124
    %436 = vmatprep.subr.mxu0 0.0
    %437 = vmatpush1.msra.mxu0 0.0
    %438 = vmatprep.subr.mxu0 0.0
    %439 = vmatpush1.msra.mxu0 0.0
    %440 = vmatprep.subr.mxu0 0.0
    %441 = vmatpush1.msra.mxu0 0.0
    %442 = vmatprep.subr.mxu0 0.0
    %443 = vmatpush1.msra.mxu0 0.0
    %444 = vmatprep.subr.mxu0 0.0
    %445 = vmatpush1.msra.mxu0 0.0
    %446 = vmatprep.subr.mxu0 0.0
    %447 = vmatpush1.msra.mxu0 0.0
    %448 = vmatprep.subr.mxu0 0.0
    %449 = vmatpush1.msra.mxu0 0.0
    %450 = vmatprep.subr.mxu0 0.0
    %451 = vmatpush1.msra.mxu0 0.0
    %452 = vmatprep.subr.mxu0 0.0
    %453 = vmatpush1.msra.mxu0 0.0
    %454 = vmatprep.subr.mxu0 0.0
    %455 = vmatpush1.msra.mxu0 0.0
    %456 = vmatprep.subr.mxu0 0.0
    %457 = vmatpush1.msra.mxu0 0.0
    %458 = vmatprep.subr.mxu0 0.0
    %459 = vmatpush1.msra.mxu0 0.0
    %460 = vmatprep.subr.mxu0 0.0
    %461 = vmatpush1.msra.mxu0 0.0
    %462 = vmatprep.subr.mxu0 0.0
    %463 = vmatpush1.msra.mxu0 0.0
    %464 = vmatprep.subr.mxu0 0.0
    %465 = vmatpush1.msra.mxu0 0.0
    %466 = vmatprep.subr.mxu0 0.0
    %467 = vmatpush1.msra.mxu0 0.0
    %468 = vmatprep.subr.mxu0 0.0
    %469 = vmatpush1.msra.mxu0 0.0
    %470 = vmatprep.subr.mxu0 0.0
    %471 = vmatpush1.msra.mxu0 0.0
    %472 = vmatprep.subr.mxu0 0.0
    %473 = vmatpush1.msra.mxu0 0.0
    %474 = vmatprep.subr.mxu0 0.0
    %475 = vmatpush1.msra.mxu0 0.0
    %476 = vmatprep.subr.mxu0 0.0
    %477 = vmatpush1.msra.mxu0 0.0
    %478 = vmatprep.subr.mxu0 0.0
    %479 = vmatpush1.msra.mxu0 0.0
    %480 = vmatprep.subr.mxu0 0.0
    %481 = vmatpush1.msra.mxu0 0.0
    %482 = vmatprep.subr.mxu0 0.0
    %483 = vmatpush1.msra.mxu0 0.0
    %484 = vmatprep.subr.mxu0 0.0
    %485 = vmatpush1.msra.mxu0 0.0
    %486 = vmatprep.subr.mxu0 0.0
    %487 = vmatpush1.msra.mxu0 0.0
    %488 = vmatprep.subr.mxu0 0.0
    %489 = vmatpush1.msra.mxu0 0.0
    %490 = vmatprep.subr.mxu0 0.0
    %491 = vmatpush1.msra.mxu0 0.0
    %492 = vmatprep.mubr.f32.mxu0 0.0
    %493 = vmatmul.mubr.f32.gmra.mrb[0].mxu0 %v426
    %v494 = vpop.f32.mrb[0].mxu0
    %v495 = vadd.f32 0.0, %v494
    %v496 = vpop.f32.mrb[0].mxu0
    %497 = vdwg.mxu0
    %v499 = vrot.slane %v495, 4
    %v501 = vadd.f32 %v209, %v499
    %v502 = vxor.u32 %v501, 2147483648
    %v503 = vmul.f32 %v502, 1.442695
    %v504 = vpow.pop %v503
    %v505 = vadd.f32 %v504, 1.0
    %v506 = vrcp.pop %v505
    %v507 = vmul.f32 1.0, %v506
    %v508 = vtanh.pop %v501
    %v510 = vrot.slane %v415, 6
    %v512 = vmul.f32 %v507, %v510
    %514 = vrot.lane.b32.xlu0 %v508, 64
    %v515 = vpop.permute.xlu0 %514
    %v517 = vmul.f32 %v507, %v515
    %519 = vrot.lane.b32.xlu0 %v517, 32
    %v520 = vpop.permute.xlu0 %519
    %v522 = vadd.f32 %v512, %v520
    %v523 = vtanh.pop %v522
    %525 = vrot.lane.b32.xlu0 %v523, 64
    %v526 = vpop.permute.xlu0 %525
    %v528 = vmul.f32 %v507, %v526
    %v530 = vrot.slane %v528, 4
    %531 = vrot.lane.b32.xlu0 %v530, 32
    %v532 = vpop.permute.xlu0 %531
    %v533 = vsel %vm217, %v532, 0
    %535 = vmatprep.subr.mxu0 0.0
    %536 = vmatpush1.msra.mxu0 %v121
    %537 = vmatprep.subr.mxu0 0.0
    %538 = vmatpush1.msra.mxu0 %v122
    %539 = vmatprep.subr.mxu0 0.0
    %540 = vmatpush1.msra.mxu0 %v123
    %541 = vmatprep.subr.mxu0 0.0
    %542 = vmatpush1.msra.mxu0 %v124
    %543 = vmatprep.subr.mxu0 0.0
    %544 = vmatpush1.msra.mxu0 0.0
    %545 = vmatprep.subr.mxu0 0.0
    %546 = vmatpush1.msra.mxu0 0.0
    %547 = vmatprep.subr.mxu0 0.0
    %548 = vmatpush1.msra.mxu0 0.0
    %549 = vmatprep.subr.mxu0 0.0
    %550 = vmatpush1.msra.mxu0 0.0
    %551 = vmatprep.subr.mxu0 0.0
    %552 = vmatpush1.msra.mxu0 0.0
    %553 = vmatprep.subr.mxu0 0.0
    %554 = vmatpush1.msra.mxu0 0.0
    %555 = vmatprep.subr.mxu0 0.0
    %556 = vmatpush1.msra.mxu0 0.0
    %557 = vmatprep.subr.mxu0 0.0
    %558 = vmatpush1.msra.mxu0 0.0
    %559 = vmatprep.subr.mxu0 0.0
    %560 = vmatpush1.msra.mxu0 0.0
    %561 = vmatprep.subr.mxu0 0.0
    %562 = vmatpush1.msra.mxu0 0.0
    %563 = vmatprep.subr.mxu0 0.0
    %564 = vmatpush1.msra.mxu0 0.0
    %565 = vmatprep.subr.mxu0 0.0
    %566 = vmatpush1.msra.mxu0 0.0
    %567 = vmatprep.subr.mxu0 0.0
    %568 = vmatpush1.msra.mxu0 0.0
    %569 = vmatprep.subr.mxu0 0.0
    %570 = vmatpush1.msra.mxu0 0.0
    %571 = vmatprep.subr.mxu0 0.0
    %572 = vmatpush1.msra.mxu0 0.0
    %573 = vmatprep.subr.mxu0 0.0
    %574 = vmatpush1.msra.mxu0 0.0
    %575 = vmatprep.subr.mxu0 0.0
    %576 = vmatpush1.msra.mxu0 0.0
    %577 = vmatprep.subr.mxu0 0.0
    %578 = vmatpush1.msra.mxu0 0.0
    %579 = vmatprep.subr.mxu0 0.0
    %580 = vmatpush1.msra.mxu0 0.0
    %581 = vmatprep.subr.mxu0 0.0
    %582 = vmatpush1.msra.mxu0 0.0
    %583 = vmatprep.subr.mxu0 0.0
    %584 = vmatpush1.msra.mxu0 0.0
    %585 = vmatprep.subr.mxu0 0.0
    %586 = vmatpush1.msra.mxu0 0.0
    %587 = vmatprep.subr.mxu0 0.0
    %588 = vmatpush1.msra.mxu0 0.0
    %589 = vmatprep.subr.mxu0 0.0
    %590 = vmatpush1.msra.mxu0 0.0
    %591 = vmatprep.subr.mxu0 0.0
    %592 = vmatpush1.msra.mxu0 0.0
    %593 = vmatprep.subr.mxu0 0.0
    %594 = vmatpush1.msra.mxu0 0.0
    %595 = vmatprep.subr.mxu0 0.0
    %596 = vmatpush1.msra.mxu0 0.0
    %597 = vmatprep.subr.mxu0 0.0
    %598 = vmatpush1.msra.mxu0 0.0
    %599 = vmatprep.mubr.f32.mxu0 0.0
    %600 = vmatmul.mubr.f32.gmra.mrb[0].mxu0 %v533
    %v601 = vpop.f32.mrb[0].mxu0
    %v602 = vadd.f32 0.0, %v601
    %v603 = vpop.f32.mrb[0].mxu0
    %604 = vdwg.mxu0
    %v606 = vrot.slane %v602, 2
    %v608 = vadd.f32 %v209, %v606
    %v609 = vxor.u32 %v608, 2147483648
    %v610 = vmul.f32 %v609, 1.442695
    %v611 = vpow.pop %v610
    %v612 = vadd.f32 %v611, 1.0
    %v613 = vrcp.pop %v612
    %v614 = vmul.f32 1.0, %v613
    %v615 = vtanh.pop %v608
    %v617 = vrot.slane %v522, 6
    %v619 = vmul.f32 %v614, %v617
    %621 = vrot.lane.b32.xlu0 %v615, 64
    %v622 = vpop.permute.xlu0 %621
    %v624 = vmul.f32 %v614, %v622
    %626 = vrot.lane.b32.xlu0 %v624, 32
    %v627 = vpop.permute.xlu0 %626
    %v629 = vadd.f32 %v619, %v627
    %v630 = vtanh.pop %v629
    %632 = vrot.lane.b32.xlu0 %v630, 64
    %v633 = vpop.permute.xlu0 %632
    %v635 = vmul.f32 %v614, %v633
    %v637 = vrot.slane %v635, 6
    %638 = vrot.lane.b32.xlu0 %v637, 32
    %v639 = vpop.permute.xlu0 %638
    %v640 = vsel %vm217, %v639, 0
    %642 = vmatprep.subr.mxu0 0.0
    %643 = vmatpush1.msra.mxu0 %v121
    %644 = vmatprep.subr.mxu0 0.0
    %645 = vmatpush1.msra.mxu0 %v122
    %646 = vmatprep.subr.mxu0 0.0
    %647 = vmatpush1.msra.mxu0 %v123
    %648 = vmatprep.subr.mxu0 0.0
    %649 = vmatpush1.msra.mxu0 %v124
    %650 = vmatprep.subr.mxu0 0.0
    %651 = vmatpush1.msra.mxu0 0.0
    %652 = vmatprep.subr.mxu0 0.0
    %653 = vmatpush1.msra.mxu0 0.0
    %654 = vmatprep.subr.mxu0 0.0
    %655 = vmatpush1.msra.mxu0 0.0
    %656 = vmatprep.subr.mxu0 0.0
    %657 = vmatpush1.msra.mxu0 0.0
    %658 = vmatprep.subr.mxu0 0.0
    %659 = vmatpush1.msra.mxu0 0.0
    %660 = vmatprep.subr.mxu0 0.0
    %661 = vmatpush1.msra.mxu0 0.0
    %662 = vmatprep.subr.mxu0 0.0
    %663 = vmatpush1.msra.mxu0 0.0
    %664 = vmatprep.subr.mxu0 0.0
    %665 = vmatpush1.msra.mxu0 0.0
    %666 = vmatprep.subr.mxu0 0.0
    %667 = vmatpush1.msra.mxu0 0.0
    %668 = vmatprep.subr.mxu0 0.0
    %669 = vmatpush1.msra.mxu0 0.0
    %670 = vmatprep.subr.mxu0 0.0
    %671 = vmatpush1.msra.mxu0 0.0
    %672 = vmatprep.subr.mxu0 0.0
    %673 = vmatpush1.msra.mxu0 0.0
    %674 = vmatprep.subr.mxu0 0.0
    %675 = vmatpush1.msra.mxu0 0.0
    %676 = vmatprep.subr.mxu0 0.0
    %677 = vmatpush1.msra.mxu0 0.0
    %678 = vmatprep.subr.mxu0 0.0
    %679 = vmatpush1.msra.mxu0 0.0
    %680 = vmatprep.subr.mxu0 0.0
    %681 = vmatpush1.msra.mxu0 0.0
    %682 = vmatprep.subr.mxu0 0.0
    %683 = vmatpush1.msra.mxu0 0.0
    %684 = vmatprep.subr.mxu0 0.0
    %685 = vmatpush1.msra.mxu0 0.0
    %686 = vmatprep.subr.mxu0 0.0
    %687 = vmatpush1.msra.mxu0 0.0
    %688 = vmatprep.subr.mxu0 0.0
    %689 = vmatpush1.msra.mxu0 0.0
    %690 = vmatprep.subr.mxu0 0.0
    %691 = vmatpush1.msra.mxu0 0.0
    %692 = vmatprep.subr.mxu0 0.0
    %693 = vmatpush1.msra.mxu0 0.0
    %694 = vmatprep.subr.mxu0 0.0
    %695 = vmatpush1.msra.mxu0 0.0
    %696 = vmatprep.subr.mxu0 0.0
    %697 = vmatpush1.msra.mxu0 0.0
    %698 = vmatprep.subr.mxu0 0.0
    %699 = vmatpush1.msra.mxu0 0.0
    %700 = vmatprep.subr.mxu0 0.0
    %701 = vmatpush1.msra.mxu0 0.0
    %702 = vmatprep.subr.mxu0 0.0
    %703 = vmatpush1.msra.mxu0 0.0
    %704 = vmatprep.subr.mxu0 0.0
    %705 = vmatpush1.msra.mxu0 0.0
    %706 = vmatprep.mubr.f32.mxu0 0.0
    %707 = vmatmul.mubr.f32.gmra.mrb[0].mxu0 %v640
    %v708 = vpop.f32.mrb[0].mxu0
    %v709 = vadd.f32 0.0, %v708
    %v710 = vpop.f32.mrb[0].mxu0
    %711 = vdwg.mxu0
    %v712 = vadd.f32 %v214, %v709
    %v713 = vxor.u32 %v712, 2147483648
    %v714 = vmul.f32 %v713, 1.442695
    %v715 = vpow.pop %v714
    %v716 = vadd.f32 %v715, 1.0
    %v717 = vrcp.pop %v716
    %v718 = vmul.f32 1.0, %v717
    %v719 = vtanh.pop %v712
    %v721 = vrot.slane %v629, 6
    %v723 = vmul.f32 %v718, %v721
    %725 = vrot.lane.b32.xlu0 %v719, 64
    %v726 = vpop.permute.xlu0 %725
    %v728 = vmul.f32 %v718, %v726
    %730 = vrot.lane.b32.xlu0 %v728, 32
    %v731 = vpop.permute.xlu0 %730
    %v733 = vadd.f32 %v723, %v731
    %v734 = vtanh.pop %v733
    %736 = vrot.lane.b32.xlu0 %v734, 64
    %v737 = vpop.permute.xlu0 %736
    %v739 = vmul.f32 %v718, %v737
    %741 = vrot.lane.b32.xlu0 %v739, 32
    %v742 = vpop.permute.xlu0 %741
    %v743 = vsel %vm217, %v742, 0
    %745 = vmatprep.subr.mxu0 0.0
    %746 = vmatpush1.msra.mxu0 %v121
    %747 = vmatprep.subr.mxu0 0.0
    %748 = vmatpush1.msra.mxu0 %v122
    %749 = vmatprep.subr.mxu0 0.0
    %750 = vmatpush1.msra.mxu0 %v123
    %751 = vmatprep.subr.mxu0 0.0
    %752 = vmatpush1.msra.mxu0 %v124
    %753 = vmatprep.subr.mxu0 0.0
    %754 = vmatpush1.msra.mxu0 0.0
    %755 = vmatprep.subr.mxu0 0.0
    %756 = vmatpush1.msra.mxu0 0.0
    %757 = vmatprep.subr.mxu0 0.0
    %758 = vmatpush1.msra.mxu0 0.0
    %759 = vmatprep.subr.mxu0 0.0
    %760 = vmatpush1.msra.mxu0 0.0
    %761 = vmatprep.subr.mxu0 0.0
    %762 = vmatpush1.msra.mxu0 0.0
    %763 = vmatprep.subr.mxu0 0.0
    %764 = vmatpush1.msra.mxu0 0.0
    %765 = vmatprep.subr.mxu0 0.0
    %766 = vmatpush1.msra.mxu0 0.0
    %767 = vmatprep.subr.mxu0 0.0
    %768 = vmatpush1.msra.mxu0 0.0
    %769 = vmatprep.subr.mxu0 0.0
    %770 = vmatpush1.msra.mxu0 0.0
    %771 = vmatprep.subr.mxu0 0.0
    %772 = vmatpush1.msra.mxu0 0.0
    %773 = vmatprep.subr.mxu0 0.0
    %774 = vmatpush1.msra.mxu0 0.0
    %775 = vmatprep.subr.mxu0 0.0
    %776 = vmatpush1.msra.mxu0 0.0
    %777 = vmatprep.subr.mxu0 0.0
    %778 = vmatpush1.msra.mxu0 0.0
    %779 = vmatprep.subr.mxu0 0.0
    %780 = vmatpush1.msra.mxu0 0.0
    %781 = vmatprep.subr.mxu0 0.0
    %782 = vmatpush1.msra.mxu0 0.0
    %783 = vmatprep.subr.mxu0 0.0
    %784 = vmatpush1.msra.mxu0 0.0
    %785 = vmatprep.subr.mxu0 0.0
    %786 = vmatpush1.msra.mxu0 0.0
    %787 = vmatprep.subr.mxu0 0.0
    %788 = vmatpush1.msra.mxu0 0.0
    %789 = vmatprep.subr.mxu0 0.0
    %790 = vmatpush1.msra.mxu0 0.0
    %791 = vmatprep.subr.mxu0 0.0
    %792 = vmatpush1.msra.mxu0 0.0
    %793 = vmatprep.subr.mxu0 0.0
    %794 = vmatpush1.msra.mxu0 0.0
    %795 = vmatprep.subr.mxu0 0.0
    %796 = vmatpush1.msra.mxu0 0.0
    %797 = vmatprep.subr.mxu0 0.0
    %798 = vmatpush1.msra.mxu0 0.0
    %799 = vmatprep.subr.mxu0 0.0
    %800 = vmatpush1.msra.mxu0 0.0
    %801 = vmatprep.subr.mxu0 0.0
    %802 = vmatpush1.msra.mxu0 0.0
    %803 = vmatprep.subr.mxu0 0.0
    %804 = vmatpush1.msra.mxu0 0.0
    %805 = vmatprep.subr.mxu0 0.0
    %806 = vmatpush1.msra.mxu0 0.0
    %807 = vmatprep.subr.mxu0 0.0
    %808 = vmatpush1.msra.mxu0 0.0
    %809 = vmatprep.mubr.f32.mxu0 0.0
    %810 = vmatmul.mubr.f32.gmra.mrb[0].mxu0 %v743
    %v811 = vpop.f32.mrb[0].mxu0
    %v812 = vadd.f32 0.0, %v811
    %v813 = vpop.f32.mrb[0].mxu0
    %814 = vdwg.mxu0
    %v816 = vrot.slane %v812, 6
    %v818 = vadd.f32 %v214, %v816
    %v819 = vxor.u32 %v818, 2147483648
    %v820 = vmul.f32 %v819, 1.442695
    %v821 = vpow.pop %v820
    %v822 = vadd.f32 %v821, 1.0
    %v823 = vrcp.pop %v822
    %v824 = vmul.f32 1.0, %v823
    %v825 = vtanh.pop %v818
    %v827 = vrot.slane %v733, 6
    %v829 = vmul.f32 %v824, %v827
    %831 = vrot.lane.b32.xlu0 %v825, 64
    %v832 = vpop.permute.xlu0 %831
    %v834 = vmul.f32 %v824, %v832
    %836 = vrot.lane.b32.xlu0 %v834, 32
    %v837 = vpop.permute.xlu0 %836
    %v839 = vadd.f32 %v829, %v837
    %v840 = vtanh.pop %v839
    %842 = vrot.lane.b32.xlu0 %v840, 64
    %v843 = vpop.permute.xlu0 %842
    %v845 = vmul.f32 %v824, %v843
    %v847 = vrot.slane %v845, 2
    %848 = vrot.lane.b32.xlu0 %v847, 32
    %v849 = vpop.permute.xlu0 %848
    %v850 = vsel %vm217, %v849, 0
    %852 = vmatprep.subr.mxu0 0.0
    %853 = vmatpush1.msra.mxu0 %v121
    %854 = vmatprep.subr.mxu0 0.0
    %855 = vmatpush1.msra.mxu0 %v122
    %856 = vmatprep.subr.mxu0 0.0
    %857 = vmatpush1.msra.mxu0 %v123
    %858 = vmatprep.subr.mxu0 0.0
    %859 = vmatpush1.msra.mxu0 %v124
    %860 = vmatprep.subr.mxu0 0.0
    %861 = vmatpush1.msra.mxu0 0.0
    %862 = vmatprep.subr.mxu0 0.0
    %863 = vmatpush1.msra.mxu0 0.0
    %864 = vmatprep.subr.mxu0 0.0
    %865 = vmatpush1.msra.mxu0 0.0
    %866 = vmatprep.subr.mxu0 0.0
    %867 = vmatpush1.msra.mxu0 0.0
    %868 = vmatprep.subr.mxu0 0.0
    %869 = vmatpush1.msra.mxu0 0.0
    %870 = vmatprep.subr.mxu0 0.0
    %871 = vmatpush1.msra.mxu0 0.0
    %872 = vmatprep.subr.mxu0 0.0
    %873 = vmatpush1.msra.mxu0 0.0
    %874 = vmatprep.subr.mxu0 0.0
    %875 = vmatpush1.msra.mxu0 0.0
    %876 = vmatprep.subr.mxu0 0.0
    %877 = vmatpush1.msra.mxu0 0.0
    %878 = vmatprep.subr.mxu0 0.0
    %879 = vmatpush1.msra.mxu0 0.0
    %880 = vmatprep.subr.mxu0 0.0
    %881 = vmatpush1.msra.mxu0 0.0
    %882 = vmatprep.subr.mxu0 0.0
    %883 = vmatpush1.msra.mxu0 0.0
    %884 = vmatprep.subr.mxu0 0.0
    %885 = vmatpush1.msra.mxu0 0.0
    %886 = vmatprep.subr.mxu0 0.0
    %887 = vmatpush1.msra.mxu0 0.0
    %888 = vmatprep.subr.mxu0 0.0
    %889 = vmatpush1.msra.mxu0 0.0
    %890 = vmatprep.subr.mxu0 0.0
    %891 = vmatpush1.msra.mxu0 0.0
    %892 = vmatprep.subr.mxu0 0.0
    %893 = vmatpush1.msra.mxu0 0.0
    %894 = vmatprep.subr.mxu0 0.0
    %895 = vmatpush1.msra.mxu0 0.0
    %896 = vmatprep.subr.mxu0 0.0
    %897 = vmatpush1.msra.mxu0 0.0
    %898 = vmatprep.subr.mxu0 0.0
    %899 = vmatpush1.msra.mxu0 0.0
    %900 = vmatprep.subr.mxu0 0.0
    %901 = vmatpush1.msra.mxu0 0.0
    %902 = vmatprep.subr.mxu0 0.0
    %903 = vmatpush1.msra.mxu0 0.0
    %904 = vmatprep.subr.mxu0 0.0
    %905 = vmatpush1.msra.mxu0 0.0
    %906 = vmatprep.subr.mxu0 0.0
    %907 = vmatpush1.msra.mxu0 0.0
    %908 = vmatprep.subr.mxu0 0.0
    %909 = vmatpush1.msra.mxu0 0.0
    %910 = vmatprep.subr.mxu0 0.0
    %911 = vmatpush1.msra.mxu0 0.0
    %912 = vmatprep.subr.mxu0 0.0
    %913 = vmatpush1.msra.mxu0 0.0
    %914 = vmatprep.subr.mxu0 0.0
    %915 = vmatpush1.msra.mxu0 0.0
    %916 = vmatprep.mubr.f32.mxu0 0.0
    %917 = vmatmul.mubr.f32.gmra.mrb[0].mxu0 %v850
    %v918 = vpop.f32.mrb[0].mxu0
    %v919 = vadd.f32 0.0, %v918
    %v920 = vpop.f32.mrb[0].mxu0
    %921 = vdwg.mxu0
    %v923 = vrot.slane %v919, 4
    %v925 = vadd.f32 %v214, %v923
    %v926 = vxor.u32 %v925, 2147483648
    %v927 = vmul.f32 %v926, 1.442695
    %v928 = vpow.pop %v927
    %v929 = vadd.f32 %v928, 1.0
    %v930 = vrcp.pop %v929
    %v931 = vmul.f32 1.0, %v930
    %v932 = vtanh.pop %v925
    %v934 = vrot.slane %v839, 6
    %v936 = vmul.f32 %v931, %v934
    %938 = vrot.lane.b32.xlu0 %v932, 64
    %v939 = vpop.permute.xlu0 %938
    %v941 = vmul.f32 %v931, %v939
    %943 = vrot.lane.b32.xlu0 %v941, 32
    %v944 = vpop.permute.xlu0 %943
    %v946 = vadd.f32 %v936, %v944
    %v947 = vtanh.pop %v946
    %949 = vrot.lane.b32.xlu0 %v947, 64
    %v950 = vpop.permute.xlu0 %949
    %v952 = vmul.f32 %v931, %v950
    %v954 = vrot.slane %v952, 4
    %955 = vrot.lane.b32.xlu0 %v954, 32
    %v956 = vpop.permute.xlu0 %955
    %v957 = vsel %vm217, %v956, 0
    %959 = vmatprep.subr.mxu0 0.0
    %960 = vmatpush1.msra.mxu0 %v121
    %961 = vmatprep.subr.mxu0 0.0
    %962 = vmatpush1.msra.mxu0 %v122
    %963 = vmatprep.subr.mxu0 0.0
    %964 = vmatpush1.msra.mxu0 %v123
    %965 = vmatprep.subr.mxu0 0.0
    %966 = vmatpush1.msra.mxu0 %v124
    %967 = vmatprep.subr.mxu0 0.0
    %968 = vmatpush1.msra.mxu0 0.0
    %969 = vmatprep.subr.mxu0 0.0
    %970 = vmatpush1.msra.mxu0 0.0
    %971 = vmatprep.subr.mxu0 0.0
    %972 = vmatpush1.msra.mxu0 0.0
    %973 = vmatprep.subr.mxu0 0.0
    %974 = vmatpush1.msra.mxu0 0.0
    %975 = vmatprep.subr.mxu0 0.0
    %976 = vmatpush1.msra.mxu0 0.0
    %977 = vmatprep.subr.mxu0 0.0
    %978 = vmatpush1.msra.mxu0 0.0
    %979 = vmatprep.subr.mxu0 0.0
    %980 = vmatpush1.msra.mxu0 0.0
    %981 = vmatprep.subr.mxu0 0.0
    %982 = vmatpush1.msra.mxu0 0.0
    %983 = vmatprep.subr.mxu0 0.0
    %984 = vmatpush1.msra.mxu0 0.0
    %985 = vmatprep.subr.mxu0 0.0
    %986 = vmatpush1.msra.mxu0 0.0
    %987 = vmatprep.subr.mxu0 0.0
    %988 = vmatpush1.msra.mxu0 0.0
    %989 = vmatprep.subr.mxu0 0.0
    %990 = vmatpush1.msra.mxu0 0.0
    %991 = vmatprep.subr.mxu0 0.0
    %992 = vmatpush1.msra.mxu0 0.0
    %993 = vmatprep.subr.mxu0 0.0
    %994 = vmatpush1.msra.mxu0 0.0
    %995 = vmatprep.subr.mxu0 0.0
    %996 = vmatpush1.msra.mxu0 0.0
    %997 = vmatprep.subr.mxu0 0.0
    %998 = vmatpush1.msra.mxu0 0.0
    %999 = vmatprep.subr.mxu0 0.0
    %1000 = vmatpush1.msra.mxu0 0.0
    %1001 = vmatprep.subr.mxu0 0.0
    %1002 = vmatpush1.msra.mxu0 0.0
    %1003 = vmatprep.subr.mxu0 0.0
    %1004 = vmatpush1.msra.mxu0 0.0
    %1005 = vmatprep.subr.mxu0 0.0
    %1006 = vmatpush1.msra.mxu0 0.0
    %1007 = vmatprep.subr.mxu0 0.0
    %1008 = vmatpush1.msra.mxu0 0.0
    %1009 = vmatprep.subr.mxu0 0.0
    %1010 = vmatpush1.msra.mxu0 0.0
    %1011 = vmatprep.subr.mxu0 0.0
    %1012 = vmatpush1.msra.mxu0 0.0
    %1013 = vmatprep.subr.mxu0 0.0
    %1014 = vmatpush1.msra.mxu0 0.0
    %1015 = vmatprep.subr.mxu0 0.0
    %1016 = vmatpush1.msra.mxu0 0.0
    %1017 = vmatprep.subr.mxu0 0.0
    %1018 = vmatpush1.msra.mxu0 0.0
    %1019 = vmatprep.subr.mxu0 0.0
    %1020 = vmatpush1.msra.mxu0 0.0
    %1021 = vmatprep.subr.mxu0 0.0
    %1022 = vmatpush1.msra.mxu0 0.0
    %1023 = vmatprep.mubr.f32.mxu0 0.0
    %1024 = vmatmul.mubr.f32.gmra.mrb[0].mxu0 %v957
    %v1025 = vpop.f32.mrb[0].mxu0
    %v1026 = vadd.f32 0.0, %v1025
    %v1027 = vpop.f32.mrb[0].mxu0
    %1028 = vdwg.mxu0
    %v1030 = vrot.slane %v1026, 2
    %v1032 = vadd.f32 %v214, %v1030
    %v1033 = vxor.u32 %v1032, 2147483648
    %v1034 = vmul.f32 %v1033, 1.442695
    %v1035 = vpow.pop %v1034
    %v1036 = vadd.f32 %v1035, 1.0
    %v1037 = vrcp.pop %v1036
    %v1038 = vmul.f32 1.0, %v1037
    %v1039 = vtanh.pop %v1032
    %v1041 = vrot.slane %v946, 6
    %v1043 = vmul.f32 %v1038, %v1041
    %1045 = vrot.lane.b32.xlu0 %v1039, 64
    %v1046 = vpop.permute.xlu0 %1045
    %v1048 = vmul.f32 %v1038, %v1046
    %1050 = vrot.lane.b32.xlu0 %v1048, 32
    %v1051 = vpop.permute.xlu0 %1050
    %v1053 = vadd.f32 %v1043, %v1051
    %v1054 = vtanh.pop %v1053
    %1056 = vrot.lane.b32.xlu0 %v1054, 64
    %v1057 = vpop.permute.xlu0 %1056
    %v1059 = vmul.f32 %v1038, %v1057
    %v1060 = vsel %vm111, %v315, %v421
    %v1061 = vsel %vm113, %v1060, %v528
    %v1062 = vsel %vm115, %v1061, %v635
    %v1063 = vsel %vm111, %v739, %v845
    %v1064 = vsel %vm113, %v1063, %v952
    %v1065 = vsel %vm115, %v1064, %v1059
    %v1066 = vld [vmem:[#allocation5] sm:$0xff]
    %v1067 = vld [vmem:[#allocation5 + $0x8] sm:$0xff]
    %v1068 = vld [vmem:[#allocation5 + $0x10] sm:$0xff]
    %v1069 = vld [vmem:[#allocation5 + $0x18] sm:$0xff]
    %v1070 = vld [vmem:[#allocation7] sm:$0xff]
    %v1071 = vld [vmem:[#allocation7 + $0x8] sm:$0xff]
    %v1072 = vld [vmem:[#allocation7 + $0x10] sm:$0xff]
    %v1073 = vld [vmem:[#allocation7 + $0x18] sm:$0xff]
    %v1074 = vld [vmem:[%s6] sm:$0x1]
    %v1076 = vlaneseq
    %v1077 = vshrl.u32 %v1076, 7
    %v1078 = vsub.s32 0, %v1077
    %v1079 = vrot.slane %v1074, %v1078
    %1083 = vrot.lane.b32.xlu0 %v1062, 32
    %v1084 = vpop.permute.xlu0 %1083
    %1085 = vrot.lane.b32.xlu0 %v1065, 32
    %v1086 = vpop.permute.xlu0 %1085
    %v1087 = vsel %vm217, %v1084, 0
    %v1089 = vsel %vm217, %v1086, 0
    %1091 = vmatprep.subr.mxu0 0.0
    %1092 = vmatpush1.msra.mxu0 %v1066
    %1093 = vmatprep.subr.mxu0 0.0
    %1094 = vmatpush1.msra.mxu0 %v1067
    %1095 = vmatprep.subr.mxu0 0.0
    %1096 = vmatpush1.msra.mxu0 %v1068
    %1097 = vmatprep.subr.mxu0 0.0
    %1098 = vmatpush1.msra.mxu0 %v1069
    %1099 = vmatprep.subr.mxu0 0.0
    %1100 = vmatpush1.msra.mxu0 0.0
    %1101 = vmatprep.subr.mxu0 0.0
    %1102 = vmatpush1.msra.mxu0 0.0
    %1103 = vmatprep.subr.mxu0 0.0
    %1104 = vmatpush1.msra.mxu0 0.0
    %1105 = vmatprep.subr.mxu0 0.0
    %1106 = vmatpush1.msra.mxu0 0.0
    %1107 = vmatprep.subr.mxu0 0.0
    %1108 = vmatpush1.msra.mxu0 0.0
    %1109 = vmatprep.subr.mxu0 0.0
    %1110 = vmatpush1.msra.mxu0 0.0
    %1111 = vmatprep.subr.mxu0 0.0
    %1112 = vmatpush1.msra.mxu0 0.0
    %1113 = vmatprep.subr.mxu0 0.0
    %1114 = vmatpush1.msra.mxu0 0.0
    %1115 = vmatprep.subr.mxu0 0.0
    %1116 = vmatpush1.msra.mxu0 0.0
    %1117 = vmatprep.subr.mxu0 0.0
    %1118 = vmatpush1.msra.mxu0 0.0
    %1119 = vmatprep.subr.mxu0 0.0
    %1120 = vmatpush1.msra.mxu0 0.0
    %1121 = vmatprep.subr.mxu0 0.0
    %1122 = vmatpush1.msra.mxu0 0.0
    %1123 = vmatprep.subr.mxu0 0.0
    %1124 = vmatpush1.msra.mxu0 0.0
    %1125 = vmatprep.subr.mxu0 0.0
    %1126 = vmatpush1.msra.mxu0 0.0
    %1127 = vmatprep.subr.mxu0 0.0
    %1128 = vmatpush1.msra.mxu0 0.0
    %1129 = vmatprep.subr.mxu0 0.0
    %1130 = vmatpush1.msra.mxu0 0.0
    %1131 = vmatprep.subr.mxu0 0.0
    %1132 = vmatpush1.msra.mxu0 0.0
    %1133 = vmatprep.subr.mxu0 0.0
    %1134 = vmatpush1.msra.mxu0 0.0
    %1135 = vmatprep.subr.mxu0 0.0
    %1136 = vmatpush1.msra.mxu0 0.0
    %1137 = vmatprep.subr.mxu0 0.0
    %1138 = vmatpush1.msra.mxu0 0.0
    %1139 = vmatprep.subr.mxu0 0.0
    %1140 = vmatpush1.msra.mxu0 0.0
    %1141 = vmatprep.subr.mxu0 0.0
    %1142 = vmatpush1.msra.mxu0 0.0
    %1143 = vmatprep.subr.mxu0 0.0
    %1144 = vmatpush1.msra.mxu0 0.0
    %1145 = vmatprep.subr.mxu0 0.0
    %1146 = vmatpush1.msra.mxu0 0.0
    %1147 = vmatprep.subr.mxu0 0.0
    %1148 = vmatpush1.msra.mxu0 0.0
    %1149 = vmatprep.subr.mxu0 0.0
    %1150 = vmatpush1.msra.mxu0 0.0
    %1151 = vmatprep.subr.mxu0 0.0
    %1152 = vmatpush1.msra.mxu0 0.0
    %1153 = vmatprep.subr.mxu0 0.0
    %1154 = vmatpush1.msra.mxu0 0.0
    %1155 = vmatprep.mubr.f32.mxu0 0.0
    %1156 = vmatmul.mubr.f32.gmra.mrb[0].mxu0 %v1087
    %v1157 = vpop.f32.mrb[0].mxu0
    %v1158 = vadd.f32 %v1079, %v1157
    %v1159 = vpop.f32.mrb[0].mxu0
    %1160 = vmatprep.mubr.f32.mxu0 0.0
    %1161 = vmatmul.mubr.f32.gmra.mrb[0].mxu0 %v1089
    %v1162 = vpop.f32.mrb[0].mxu0
    %v1163 = vadd.f32 %v1079, %v1162
    %v1164 = vpop.f32.mrb[0].mxu0
    %1165 = vdwg.mxu0
    %1166 = vmatprep.subr.mxu0 0.0
    %1167 = vmatpush1.msra.mxu0 %v1070
    %1168 = vmatprep.subr.mxu0 0.0
    %1169 = vmatpush1.msra.mxu0 %v1071
    %1170 = vmatprep.subr.mxu0 0.0
    %1171 = vmatpush1.msra.mxu0 %v1072
    %1172 = vmatprep.subr.mxu0 0.0
    %1173 = vmatpush1.msra.mxu0 %v1073
    %1174 = vmatprep.subr.mxu0 0.0
    %1175 = vmatpush1.msra.mxu0 0.0
    %1176 = vmatprep.subr.mxu0 0.0
    %1177 = vmatpush1.msra.mxu0 0.0
    %1178 = vmatprep.subr.mxu0 0.0
    %1179 = vmatpush1.msra.mxu0 0.0
    %1180 = vmatprep.subr.mxu0 0.0
    %1181 = vmatpush1.msra.mxu0 0.0
    %1182 = vmatprep.subr.mxu0 0.0
    %1183 = vmatpush1.msra.mxu0 0.0
    %1184 = vmatprep.subr.mxu0 0.0
    %1185 = vmatpush1.msra.mxu0 0.0
    %1186 = vmatprep.subr.mxu0 0.0
    %1187 = vmatpush1.msra.mxu0 0.0
    %1188 = vmatprep.subr.mxu0 0.0
    %1189 = vmatpush1.msra.mxu0 0.0
    %1190 = vmatprep.subr.mxu0 0.0
    %1191 = vmatpush1.msra.mxu0 0.0
    %1192 = vmatprep.subr.mxu0 0.0
    %1193 = vmatpush1.msra.mxu0 0.0
    %1194 = vmatprep.subr.mxu0 0.0
    %1195 = vmatpush1.msra.mxu0 0.0
    %1196 = vmatprep.subr.mxu0 0.0
    %1197 = vmatpush1.msra.mxu0 0.0
    %1198 = vmatprep.subr.mxu0 0.0
    %1199 = vmatpush1.msra.mxu0 0.0
    %1200 = vmatprep.subr.mxu0 0.0
    %1201 = vmatpush1.msra.mxu0 0.0
    %1202 = vmatprep.subr.mxu0 0.0
    %1203 = vmatpush1.msra.mxu0 0.0
    %1204 = vmatprep.subr.mxu0 0.0
    %1205 = vmatpush1.msra.mxu0 0.0
    %1206 = vmatprep.subr.mxu0 0.0
    %1207 = vmatpush1.msra.mxu0 0.0
    %1208 = vmatprep.subr.mxu0 0.0
    %1209 = vmatpush1.msra.mxu0 0.0
    %1210 = vmatprep.subr.mxu0 0.0
    %1211 = vmatpush1.msra.mxu0 0.0
    %1212 = vmatprep.subr.mxu0 0.0
    %1213 = vmatpush1.msra.mxu0 0.0
    %1214 = vmatprep.subr.mxu0 0.0
    %1215 = vmatpush1.msra.mxu0 0.0
    %1216 = vmatprep.subr.mxu0 0.0
    %1217 = vmatpush1.msra.mxu0 0.0
    %1218 = vmatprep.subr.mxu0 0.0
    %1219 = vmatpush1.msra.mxu0 0.0
    %1220 = vmatprep.subr.mxu0 0.0
    %1221 = vmatpush1.msra.mxu0 0.0
    %1222 = vmatprep.subr.mxu0 0.0
    %1223 = vmatpush1.msra.mxu0 0.0
    %1224 = vmatprep.subr.mxu0 0.0
    %1225 = vmatpush1.msra.mxu0 0.0
    %1226 = vmatprep.subr.mxu0 0.0
    %1227 = vmatpush1.msra.mxu0 0.0
    %1228 = vmatprep.subr.mxu0 0.0
    %1229 = vmatpush1.msra.mxu0 0.0
    %1230 = vmatprep.mubr.f32.mxu0 0.0
    %1231 = vmatmul.mubr.f32.gmra.mrb[0].mxu0 %v219
    %v1232 = vpop.f32.mrb[0].mxu0
    %v1233 = vadd.f32 0.0, %v1232
    %v1234 = vpop.f32.mrb[0].mxu0
    %1235 = vdwg.mxu0
    %v1236 = vadd.f32 %v1158, %v1233
    %v1237 = vxor.u32 %v1236, 2147483648
    %v1238 = vmul.f32 %v1237, 1.442695
    %v1239 = vpow.pop %v1238
    %v1240 = vadd.f32 %v1239, 1.0
    %v1241 = vrcp.pop %v1240
    %v1242 = vmul.f32 1.0, %v1241
    %v1243 = vtanh.pop %v1236
    %v1244 = vmul.f32 %v1242, 0.0
    %1246 = vrot.lane.b32.xlu0 %v1243, 64
    %v1247 = vpop.permute.xlu0 %1246
    %v1249 = vmul.f32 %v1242, %v1247
    %1251 = vrot.lane.b32.xlu0 %v1249, 32
    %v1252 = vpop.permute.xlu0 %1251
    %v1254 = vadd.f32 %v1244, %v1252
    %v1255 = vtanh.pop %v1254
    %1257 = vrot.lane.b32.xlu0 %v1255, 64
    %v1258 = vpop.permute.xlu0 %1257
    %v1260 = vmul.f32 %v1242, %v1258
    %1262 = vrot.lane.b32.xlu0 %v1260, 32
    %v1263 = vpop.permute.xlu0 %1262
    %v1264 = vsel %vm217, %v1263, 0
    %1266 = vmatprep.subr.mxu0 0.0
    %1267 = vmatpush1.msra.mxu0 %v1070
    %1268 = vmatprep.subr.mxu0 0.0
    %1269 = vmatpush1.msra.mxu0 %v1071
    %1270 = vmatprep.subr.mxu0 0.0
    %1271 = vmatpush1.msra.mxu0 %v1072
    %1272 = vmatprep.subr.mxu0 0.0
    %1273 = vmatpush1.msra.mxu0 %v1073
    %1274 = vmatprep.subr.mxu0 0.0
    %1275 = vmatpush1.msra.mxu0 0.0
    %1276 = vmatprep.subr.mxu0 0.0
    %1277 = vmatpush1.msra.mxu0 0.0
    %1278 = vmatprep.subr.mxu0 0.0
    %1279 = vmatpush1.msra.mxu0 0.0
    %1280 = vmatprep.subr.mxu0 0.0
    %1281 = vmatpush1.msra.mxu0 0.0
    %1282 = vmatprep.subr.mxu0 0.0
    %1283 = vmatpush1.msra.mxu0 0.0
    %1284 = vmatprep.subr.mxu0 0.0
    %1285 = vmatpush1.msra.mxu0 0.0
    %1286 = vmatprep.subr.mxu0 0.0
    %1287 = vmatpush1.msra.mxu0 0.0
    %1288 = vmatprep.subr.mxu0 0.0
    %1289 = vmatpush1.msra.mxu0 0.0
    %1290 = vmatprep.subr.mxu0 0.0
    %1291 = vmatpush1.msra.mxu0 0.0
    %1292 = vmatprep.subr.mxu0 0.0
    %1293 = vmatpush1.msra.mxu0 0.0
    %1294 = vmatprep.subr.mxu0 0.0
    %1295 = vmatpush1.msra.mxu0 0.0
    %1296 = vmatprep.subr.mxu0 0.0
    %1297 = vmatpush1.msra.mxu0 0.0
    %1298 = vmatprep.subr.mxu0 0.0
    %1299 = vmatpush1.msra.mxu0 0.0
    %1300 = vmatprep.subr.mxu0 0.0
    %1301 = vmatpush1.msra.mxu0 0.0
    %1302 = vmatprep.subr.mxu0 0.0
    %1303 = vmatpush1.msra.mxu0 0.0
    %1304 = vmatprep.subr.mxu0 0.0
    %1305 = vmatpush1.msra.mxu0 0.0
    %1306 = vmatprep.subr.mxu0 0.0
    %1307 = vmatpush1.msra.mxu0 0.0
    %1308 = vmatprep.subr.mxu0 0.0
    %1309 = vmatpush1.msra.mxu0 0.0
    %1310 = vmatprep.subr.mxu0 0.0
    %1311 = vmatpush1.msra.mxu0 0.0
    %1312 = vmatprep.subr.mxu0 0.0
    %1313 = vmatpush1.msra.mxu0 0.0
    %1314 = vmatprep.subr.mxu0 0.0
    %1315 = vmatpush1.msra.mxu0 0.0
    %1316 = vmatprep.subr.mxu0 0.0
    %1317 = vmatpush1.msra.mxu0 0.0
    %1318 = vmatprep.subr.mxu0 0.0
    %1319 = vmatpush1.msra.mxu0 0.0
    %1320 = vmatprep.subr.mxu0 0.0
    %1321 = vmatpush1.msra.mxu0 0.0
    %1322 = vmatprep.subr.mxu0 0.0
    %1323 = vmatpush1.msra.mxu0 0.0
    %1324 = vmatprep.subr.mxu0 0.0
    %1325 = vmatpush1.msra.mxu0 0.0
    %1326 = vmatprep.subr.mxu0 0.0
    %1327 = vmatpush1.msra.mxu0 0.0
    %1328 = vmatprep.subr.mxu0 0.0
    %1329 = vmatpush1.msra.mxu0 0.0
    %1330 = vmatprep.mubr.f32.mxu0 0.0
    %1331 = vmatmul.mubr.f32.gmra.mrb[0].mxu0 %v1264
    %v1332 = vpop.f32.mrb[0].mxu0
    %v1333 = vadd.f32 0.0, %v1332
    %v1334 = vpop.f32.mrb[0].mxu0
    %1335 = vdwg.mxu0
    %v1337 = vrot.slane %v1333, 6
    %v1339 = vadd.f32 %v1158, %v1337
    %v1340 = vxor.u32 %v1339, 2147483648
    %v1341 = vmul.f32 %v1340, 1.442695
    %v1342 = vpow.pop %v1341
    %v1343 = vadd.f32 %v1342, 1.0
    %v1344 = vrcp.pop %v1343
    %v1345 = vmul.f32 1.0, %v1344
    %v1346 = vtanh.pop %v1339
    %v1348 = vrot.slane %v1254, 6
    %v1350 = vmul.f32 %v1345, %v1348
    %1352 = vrot.lane.b32.xlu0 %v1346, 64
    %v1353 = vpop.permute.xlu0 %1352
    %v1355 = vmul.f32 %v1345, %v1353
    %1357 = vrot.lane.b32.xlu0 %v1355, 32
    %v1358 = vpop.permute.xlu0 %1357
    %v1360 = vadd.f32 %v1350, %v1358
    %v1361 = vtanh.pop %v1360
    %1363 = vrot.lane.b32.xlu0 %v1361, 64
    %v1364 = vpop.permute.xlu0 %1363
    %v1366 = vmul.f32 %v1345, %v1364
    %v1368 = vrot.slane %v1366, 2
    %1369 = vrot.lane.b32.xlu0 %v1368, 32
    %v1370 = vpop.permute.xlu0 %1369
    %v1371 = vsel %vm217, %v1370, 0
    %1373 = vmatprep.subr.mxu0 0.0
    %1374 = vmatpush1.msra.mxu0 %v1070
    %1375 = vmatprep.subr.mxu0 0.0
    %1376 = vmatpush1.msra.mxu0 %v1071
    %1377 = vmatprep.subr.mxu0 0.0
    %1378 = vmatpush1.msra.mxu0 %v1072
    %1379 = vmatprep.subr.mxu0 0.0
    %1380 = vmatpush1.msra.mxu0 %v1073
    %1381 = vmatprep.subr.mxu0 0.0
    %1382 = vmatpush1.msra.mxu0 0.0
    %1383 = vmatprep.subr.mxu0 0.0
    %1384 = vmatpush1.msra.mxu0 0.0
    %1385 = vmatprep.subr.mxu0 0.0
    %1386 = vmatpush1.msra.mxu0 0.0
    %1387 = vmatprep.subr.mxu0 0.0
    %1388 = vmatpush1.msra.mxu0 0.0
    %1389 = vmatprep.subr.mxu0 0.0
    %1390 = vmatpush1.msra.mxu0 0.0
    %1391 = vmatprep.subr.mxu0 0.0
    %1392 = vmatpush1.msra.mxu0 0.0
    %1393 = vmatprep.subr.mxu0 0.0
    %1394 = vmatpush1.msra.mxu0 0.0
    %1395 = vmatprep.subr.mxu0 0.0
    %1396 = vmatpush1.msra.mxu0 0.0
    %1397 = vmatprep.subr.mxu0 0.0
    %1398 = vmatpush1.msra.mxu0 0.0
    %1399 = vmatprep.subr.mxu0 0.0
    %1400 = vmatpush1.msra.mxu0 0.0
    %1401 = vmatprep.subr.mxu0 0.0
    %1402 = vmatpush1.msra.mxu0 0.0
    %1403 = vmatprep.subr.mxu0 0.0
    %1404 = vmatpush1.msra.mxu0 0.0
    %1405 = vmatprep.subr.mxu0 0.0
    %1406 = vmatpush1.msra.mxu0 0.0
    %1407 = vmatprep.subr.mxu0 0.0
    %1408 = vmatpush1.msra.mxu0 0.0
    %1409 = vmatprep.subr.mxu0 0.0
    %1410 = vmatpush1.msra.mxu0 0.0
    %1411 = vmatprep.subr.mxu0 0.0
    %1412 = vmatpush1.msra.mxu0 0.0
    %1413 = vmatprep.subr.mxu0 0.0
    %1414 = vmatpush1.msra.mxu0 0.0
    %1415 = vmatprep.subr.mxu0 0.0
    %1416 = vmatpush1.msra.mxu0 0.0
    %1417 = vmatprep.subr.mxu0 0.0
    %1418 = vmatpush1.msra.mxu0 0.0
    %1419 = vmatprep.subr.mxu0 0.0
    %1420 = vmatpush1.msra.mxu0 0.0
    %1421 = vmatprep.subr.mxu0 0.0
    %1422 = vmatpush1.msra.mxu0 0.0
    %1423 = vmatprep.subr.mxu0 0.0
    %1424 = vmatpush1.msra.mxu0 0.0
    %1425 = vmatprep.subr.mxu0 0.0
    %1426 = vmatpush1.msra.mxu0 0.0
    %1427 = vmatprep.subr.mxu0 0.0
    %1428 = vmatpush1.msra.mxu0 0.0
    %1429 = vmatprep.subr.mxu0 0.0
    %1430 = vmatpush1.msra.mxu0 0.0
    %1431 = vmatprep.subr.mxu0 0.0
    %1432 = vmatpush1.msra.mxu0 0.0
    %1433 = vmatprep.subr.mxu0 0.0
    %1434 = vmatpush1.msra.mxu0 0.0
    %1435 = vmatprep.subr.mxu0 0.0
    %1436 = vmatpush1.msra.mxu0 0.0
    %1437 = vmatprep.mubr.f32.mxu0 0.0
    %1438 = vmatmul.mubr.f32.gmra.mrb[0].mxu0 %v1371
    %v1439 = vpop.f32.mrb[0].mxu0
    %v1440 = vadd.f32 0.0, %v1439
    %v1441 = vpop.f32.mrb[0].mxu0
    %1442 = vdwg.mxu0
    %v1444 = vrot.slane %v1440, 4
    %v1446 = vadd.f32 %v1158, %v1444
    %v1447 = vxor.u32 %v1446, 2147483648
    %v1448 = vmul.f32 %v1447, 1.442695
    %v1449 = vpow.pop %v1448
    %v1450 = vadd.f32 %v1449, 1.0
    %v1451 = vrcp.pop %v1450
    %v1452 = vmul.f32 1.0, %v1451
    %v1453 = vtanh.pop %v1446
    %v1455 = vrot.slane %v1360, 6
    %v1457 = vmul.f32 %v1452, %v1455
    %1459 = vrot.lane.b32.xlu0 %v1453, 64
    %v1460 = vpop.permute.xlu0 %1459
    %v1462 = vmul.f32 %v1452, %v1460
    %1464 = vrot.lane.b32.xlu0 %v1462, 32
    %v1465 = vpop.permute.xlu0 %1464
    %v1467 = vadd.f32 %v1457, %v1465
    %v1468 = vtanh.pop %v1467
    %1470 = vrot.lane.b32.xlu0 %v1468, 64
    %v1471 = vpop.permute.xlu0 %1470
    %v1473 = vmul.f32 %v1452, %v1471
    %v1475 = vrot.slane %v1473, 4
    %1476 = vrot.lane.b32.xlu0 %v1475, 32
    %v1477 = vpop.permute.xlu0 %1476
    %v1478 = vsel %vm217, %v1477, 0
    %1480 = vmatprep.subr.mxu0 0.0
    %1481 = vmatpush1.msra.mxu0 %v1070
    %1482 = vmatprep.subr.mxu0 0.0
    %1483 = vmatpush1.msra.mxu0 %v1071
    %1484 = vmatprep.subr.mxu0 0.0
    %1485 = vmatpush1.msra.mxu0 %v1072
    %1486 = vmatprep.subr.mxu0 0.0
    %1487 = vmatpush1.msra.mxu0 %v1073
    %1488 = vmatprep.subr.mxu0 0.0
    %1489 = vmatpush1.msra.mxu0 0.0
    %1490 = vmatprep.subr.mxu0 0.0
    %1491 = vmatpush1.msra.mxu0 0.0
    %1492 = vmatprep.subr.mxu0 0.0
    %1493 = vmatpush1.msra.mxu0 0.0
    %1494 = vmatprep.subr.mxu0 0.0
    %1495 = vmatpush1.msra.mxu0 0.0
    %1496 = vmatprep.subr.mxu0 0.0
    %1497 = vmatpush1.msra.mxu0 0.0
    %1498 = vmatprep.subr.mxu0 0.0
    %1499 = vmatpush1.msra.mxu0 0.0
    %1500 = vmatprep.subr.mxu0 0.0
    %1501 = vmatpush1.msra.mxu0 0.0
    %1502 = vmatprep.subr.mxu0 0.0
    %1503 = vmatpush1.msra.mxu0 0.0
    %1504 = vmatprep.subr.mxu0 0.0
    %1505 = vmatpush1.msra.mxu0 0.0
    %1506 = vmatprep.subr.mxu0 0.0
    %1507 = vmatpush1.msra.mxu0 0.0
    %1508 = vmatprep.subr.mxu0 0.0
    %1509 = vmatpush1.msra.mxu0 0.0
    %1510 = vmatprep.subr.mxu0 0.0
    %1511 = vmatpush1.msra.mxu0 0.0
    %1512 = vmatprep.subr.mxu0 0.0
    %1513 = vmatpush1.msra.mxu0 0.0
    %1514 = vmatprep.subr.mxu0 0.0
    %1515 = vmatpush1.msra.mxu0 0.0
    %1516 = vmatprep.subr.mxu0 0.0
    %1517 = vmatpush1.msra.mxu0 0.0
    %1518 = vmatprep.subr.mxu0 0.0
    %1519 = vmatpush1.msra.mxu0 0.0
    %1520 = vmatprep.subr.mxu0 0.0
    %1521 = vmatpush1.msra.mxu0 0.0
    %1522 = vmatprep.subr.mxu0 0.0
    %1523 = vmatpush1.msra.mxu0 0.0
    %1524 = vmatprep.subr.mxu0 0.0
    %1525 = vmatpush1.msra.mxu0 0.0
    %1526 = vmatprep.subr.mxu0 0.0
    %1527 = vmatpush1.msra.mxu0 0.0
    %1528 = vmatprep.subr.mxu0 0.0
    %1529 = vmatpush1.msra.mxu0 0.0
    %1530 = vmatprep.subr.mxu0 0.0
    %1531 = vmatpush1.msra.mxu0 0.0
    %1532 = vmatprep.subr.mxu0 0.0
    %1533 = vmatpush1.msra.mxu0 0.0
    %1534 = vmatprep.subr.mxu0 0.0
    %1535 = vmatpush1.msra.mxu0 0.0
    %1536 = vmatprep.subr.mxu0 0.0
    %1537 = vmatpush1.msra.mxu0 0.0
    %1538 = vmatprep.subr.mxu0 0.0
    %1539 = vmatpush1.msra.mxu0 0.0
    %1540 = vmatprep.subr.mxu0 0.0
    %1541 = vmatpush1.msra.mxu0 0.0
    %1542 = vmatprep.subr.mxu0 0.0
    %1543 = vmatpush1.msra.mxu0 0.0
    %1544 = vmatprep.mubr.f32.mxu0 0.0
    %1545 = vmatmul.mubr.f32.gmra.mrb[0].mxu0 %v1478
    %v1546 = vpop.f32.mrb[0].mxu0
    %v1547 = vadd.f32 0.0, %v1546
    %v1548 = vpop.f32.mrb[0].mxu0
    %1549 = vdwg.mxu0
    %v1551 = vrot.slane %v1547, 2
    %v1553 = vadd.f32 %v1158, %v1551
    %v1554 = vxor.u32 %v1553, 2147483648
    %v1555 = vmul.f32 %v1554, 1.442695
    %v1556 = vpow.pop %v1555
    %v1557 = vadd.f32 %v1556, 1.0
    %v1558 = vrcp.pop %v1557
    %v1559 = vmul.f32 1.0, %v1558
    %v1560 = vtanh.pop %v1553
    %v1562 = vrot.slane %v1467, 6
    %v1564 = vmul.f32 %v1559, %v1562
    %1566 = vrot.lane.b32.xlu0 %v1560, 64
    %v1567 = vpop.permute.xlu0 %1566
    %v1569 = vmul.f32 %v1559, %v1567
    %1571 = vrot.lane.b32.xlu0 %v1569, 32
    %v1572 = vpop.permute.xlu0 %1571
    %v1574 = vadd.f32 %v1564, %v1572
    %v1575 = vtanh.pop %v1574
    %1577 = vrot.lane.b32.xlu0 %v1575, 64
    %v1578 = vpop.permute.xlu0 %1577
    %v1580 = vmul.f32 %v1559, %v1578
    %v1582 = vrot.slane %v1580, 6
    %1583 = vrot.lane.b32.xlu0 %v1582, 32
    %v1584 = vpop.permute.xlu0 %1583
    %v1585 = vsel %vm217, %v1584, 0
    %1587 = vmatprep.subr.mxu0 0.0
    %1588 = vmatpush1.msra.mxu0 %v1070
    %1589 = vmatprep.subr.mxu0 0.0
    %1590 = vmatpush1.msra.mxu0 %v1071
    %1591 = vmatprep.subr.mxu0 0.0
    %1592 = vmatpush1.msra.mxu0 %v1072
    %1593 = vmatprep.subr.mxu0 0.0
    %1594 = vmatpush1.msra.mxu0 %v1073
    %1595 = vmatprep.subr.mxu0 0.0
    %1596 = vmatpush1.msra.mxu0 0.0
    %1597 = vmatprep.subr.mxu0 0.0
    %1598 = vmatpush1.msra.mxu0 0.0
    %1599 = vmatprep.subr.mxu0 0.0
    %1600 = vmatpush1.msra.mxu0 0.0
    %1601 = vmatprep.subr.mxu0 0.0
    %1602 = vmatpush1.msra.mxu0 0.0
    %1603 = vmatprep.subr.mxu0 0.0
    %1604 = vmatpush1.msra.mxu0 0.0
    %1605 = vmatprep.subr.mxu0 0.0
    %1606 = vmatpush1.msra.mxu0 0.0
    %1607 = vmatprep.subr.mxu0 0.0
    %1608 = vmatpush1.msra.mxu0 0.0
    %1609 = vmatprep.subr.mxu0 0.0
    %1610 = vmatpush1.msra.mxu0 0.0
    %1611 = vmatprep.subr.mxu0 0.0
    %1612 = vmatpush1.msra.mxu0 0.0
    %1613 = vmatprep.subr.mxu0 0.0
    %1614 = vmatpush1.msra.mxu0 0.0
    %1615 = vmatprep.subr.mxu0 0.0
    %1616 = vmatpush1.msra.mxu0 0.0
    %1617 = vmatprep.subr.mxu0 0.0
    %1618 = vmatpush1.msra.mxu0 0.0
    %1619 = vmatprep.subr.mxu0 0.0
    %1620 = vmatpush1.msra.mxu0 0.0
    %1621 = vmatprep.subr.mxu0 0.0
    %1622 = vmatpush1.msra.mxu0 0.0
    %1623 = vmatprep.subr.mxu0 0.0
    %1624 = vmatpush1.msra.mxu0 0.0
    %1625 = vmatprep.subr.mxu0 0.0
    %1626 = vmatpush1.msra.mxu0 0.0
    %1627 = vmatprep.subr.mxu0 0.0
    %1628 = vmatpush1.msra.mxu0 0.0
    %1629 = vmatprep.subr.mxu0 0.0
    %1630 = vmatpush1.msra.mxu0 0.0
    %1631 = vmatprep.subr.mxu0 0.0
    %1632 = vmatpush1.msra.mxu0 0.0
    %1633 = vmatprep.subr.mxu0 0.0
    %1634 = vmatpush1.msra.mxu0 0.0
    %1635 = vmatprep.subr.mxu0 0.0
    %1636 = vmatpush1.msra.mxu0 0.0
    %1637 = vmatprep.subr.mxu0 0.0
    %1638 = vmatpush1.msra.mxu0 0.0
    %1639 = vmatprep.subr.mxu0 0.0
    %1640 = vmatpush1.msra.mxu0 0.0
    %1641 = vmatprep.subr.mxu0 0.0
    %1642 = vmatpush1.msra.mxu0 0.0
    %1643 = vmatprep.subr.mxu0 0.0
    %1644 = vmatpush1.msra.mxu0 0.0
    %1645 = vmatprep.subr.mxu0 0.0
    %1646 = vmatpush1.msra.mxu0 0.0
    %1647 = vmatprep.subr.mxu0 0.0
    %1648 = vmatpush1.msra.mxu0 0.0
    %1649 = vmatprep.subr.mxu0 0.0
    %1650 = vmatpush1.msra.mxu0 0.0
    %1651 = vmatprep.mubr.f32.mxu0 0.0
    %1652 = vmatmul.mubr.f32.gmra.mrb[0].mxu0 %v1585
    %v1653 = vpop.f32.mrb[0].mxu0
    %v1654 = vadd.f32 0.0, %v1653
    %v1655 = vpop.f32.mrb[0].mxu0
    %1656 = vdwg.mxu0
    %v1657 = vadd.f32 %v1163, %v1654
    %v1658 = vxor.u32 %v1657, 2147483648
    %v1659 = vmul.f32 %v1658, 1.442695
    %v1660 = vpow.pop %v1659
    %v1661 = vadd.f32 %v1660, 1.0
    %v1662 = vrcp.pop %v1661
    %v1663 = vmul.f32 1.0, %v1662
    %v1664 = vtanh.pop %v1657
    %v1666 = vrot.slane %v1574, 6
    %v1668 = vmul.f32 %v1663, %v1666
    %1670 = vrot.lane.b32.xlu0 %v1664, 64
    %v1671 = vpop.permute.xlu0 %1670
    %v1673 = vmul.f32 %v1663, %v1671
    %1675 = vrot.lane.b32.xlu0 %v1673, 32
    %v1676 = vpop.permute.xlu0 %1675
    %v1678 = vadd.f32 %v1668, %v1676
    %v1679 = vtanh.pop %v1678
    %1681 = vrot.lane.b32.xlu0 %v1679, 64
    %v1682 = vpop.permute.xlu0 %1681
    %v1684 = vmul.f32 %v1663, %v1682
    %1686 = vrot.lane.b32.xlu0 %v1684, 32
    %v1687 = vpop.permute.xlu0 %1686
    %v1688 = vsel %vm217, %v1687, 0
    %1690 = vmatprep.subr.mxu0 0.0
    %1691 = vmatpush1.msra.mxu0 %v1070
    %1692 = vmatprep.subr.mxu0 0.0
    %1693 = vmatpush1.msra.mxu0 %v1071
    %1694 = vmatprep.subr.mxu0 0.0
    %1695 = vmatpush1.msra.mxu0 %v1072
    %1696 = vmatprep.subr.mxu0 0.0
    %1697 = vmatpush1.msra.mxu0 %v1073
    %1698 = vmatprep.subr.mxu0 0.0
    %1699 = vmatpush1.msra.mxu0 0.0
    %1700 = vmatprep.subr.mxu0 0.0
    %1701 = vmatpush1.msra.mxu0 0.0
    %1702 = vmatprep.subr.mxu0 0.0
    %1703 = vmatpush1.msra.mxu0 0.0
    %1704 = vmatprep.subr.mxu0 0.0
    %1705 = vmatpush1.msra.mxu0 0.0
    %1706 = vmatprep.subr.mxu0 0.0
    %1707 = vmatpush1.msra.mxu0 0.0
    %1708 = vmatprep.subr.mxu0 0.0
    %1709 = vmatpush1.msra.mxu0 0.0
    %1710 = vmatprep.subr.mxu0 0.0
    %1711 = vmatpush1.msra.mxu0 0.0
    %1712 = vmatprep.subr.mxu0 0.0
    %1713 = vmatpush1.msra.mxu0 0.0
    %1714 = vmatprep.subr.mxu0 0.0
    %1715 = vmatpush1.msra.mxu0 0.0
    %1716 = vmatprep.subr.mxu0 0.0
    %1717 = vmatpush1.msra.mxu0 0.0
    %1718 = vmatprep.subr.mxu0 0.0
    %1719 = vmatpush1.msra.mxu0 0.0
    %1720 = vmatprep.subr.mxu0 0.0
    %1721 = vmatpush1.msra.mxu0 0.0
    %1722 = vmatprep.subr.mxu0 0.0
    %1723 = vmatpush1.msra.mxu0 0.0
    %1724 = vmatprep.subr.mxu0 0.0
    %1725 = vmatpush1.msra.mxu0 0.0
    %1726 = vmatprep.subr.mxu0 0.0
    %1727 = vmatpush1.msra.mxu0 0.0
    %1728 = vmatprep.subr.mxu0 0.0
    %1729 = vmatpush1.msra.mxu0 0.0
    %1730 = vmatprep.subr.mxu0 0.0
    %1731 = vmatpush1.msra.mxu0 0.0
    %1732 = vmatprep.subr.mxu0 0.0
    %1733 = vmatpush1.msra.mxu0 0.0
    %1734 = vmatprep.subr.mxu0 0.0
    %1735 = vmatpush1.msra.mxu0 0.0
    %1736 = vmatprep.subr.mxu0 0.0
    %1737 = vmatpush1.msra.mxu0 0.0
    %1738 = vmatprep.subr.mxu0 0.0
    %1739 = vmatpush1.msra.mxu0 0.0
    %1740 = vmatprep.subr.mxu0 0.0
    %1741 = vmatpush1.msra.mxu0 0.0
    %1742 = vmatprep.subr.mxu0 0.0
    %1743 = vmatpush1.msra.mxu0 0.0
    %1744 = vmatprep.subr.mxu0 0.0
    %1745 = vmatpush1.msra.mxu0 0.0
    %1746 = vmatprep.subr.mxu0 0.0
    %1747 = vmatpush1.msra.mxu0 0.0
    %1748 = vmatprep.subr.mxu0 0.0
    %1749 = vmatpush1.msra.mxu0 0.0
    %1750 = vmatprep.subr.mxu0 0.0
    %1751 = vmatpush1.msra.mxu0 0.0
    %1752 = vmatprep.subr.mxu0 0.0
    %1753 = vmatpush1.msra.mxu0 0.0
    %1754 = vmatprep.mubr.f32.mxu0 0.0
    %1755 = vmatmul.mubr.f32.gmra.mrb[0].mxu0 %v1688
    %v1756 = vpop.f32.mrb[0].mxu0
    %v1757 = vadd.f32 0.0, %v1756
    %v1758 = vpop.f32.mrb[0].mxu0
    %1759 = vdwg.mxu0
    %v1761 = vrot.slane %v1757, 6
    %v1763 = vadd.f32 %v1163, %v1761
    %v1764 = vxor.u32 %v1763, 2147483648
    %v1765 = vmul.f32 %v1764, 1.442695
    %v1766 = vpow.pop %v1765
    %v1767 = vadd.f32 %v1766, 1.0
    %v1768 = vrcp.pop %v1767
    %v1769 = vmul.f32 1.0, %v1768
    %v1770 = vtanh.pop %v1763
    %v1772 = vrot.slane %v1678, 6
    %v1774 = vmul.f32 %v1769, %v1772
    %1776 = vrot.lane.b32.xlu0 %v1770, 64
    %v1777 = vpop.permute.xlu0 %1776
    %v1779 = vmul.f32 %v1769, %v1777
    %1781 = vrot.lane.b32.xlu0 %v1779, 32
    %v1782 = vpop.permute.xlu0 %1781
    %v1784 = vadd.f32 %v1774, %v1782
    %v1785 = vtanh.pop %v1784
    %1787 = vrot.lane.b32.xlu0 %v1785, 64
    %v1788 = vpop.permute.xlu0 %1787
    %v1790 = vmul.f32 %v1769, %v1788
    %v1792 = vrot.slane %v1790, 2
    %1793 = vrot.lane.b32.xlu0 %v1792, 32
    %v1794 = vpop.permute.xlu0 %1793
    %v1795 = vsel %vm217, %v1794, 0
    %1797 = vmatprep.subr.mxu0 0.0
    %1798 = vmatpush1.msra.mxu0 %v1070
    %1799 = vmatprep.subr.mxu0 0.0
    %1800 = vmatpush1.msra.mxu0 %v1071
    %1801 = vmatprep.subr.mxu0 0.0
    %1802 = vmatpush1.msra.mxu0 %v1072
    %1803 = vmatprep.subr.mxu0 0.0
    %1804 = vmatpush1.msra.mxu0 %v1073
    %1805 = vmatprep.subr.mxu0 0.0
    %1806 = vmatpush1.msra.mxu0 0.0
    %1807 = vmatprep.subr.mxu0 0.0
    %1808 = vmatpush1.msra.mxu0 0.0
    %1809 = vmatprep.subr.mxu0 0.0
    %1810 = vmatpush1.msra.mxu0 0.0
    %1811 = vmatprep.subr.mxu0 0.0
    %1812 = vmatpush1.msra.mxu0 0.0
    %1813 = vmatprep.subr.mxu0 0.0
    %1814 = vmatpush1.msra.mxu0 0.0
    %1815 = vmatprep.subr.mxu0 0.0
    %1816 = vmatpush1.msra.mxu0 0.0
    %1817 = vmatprep.subr.mxu0 0.0
    %1818 = vmatpush1.msra.mxu0 0.0
    %1819 = vmatprep.subr.mxu0 0.0
    %1820 = vmatpush1.msra.mxu0 0.0
    %1821 = vmatprep.subr.mxu0 0.0
    %1822 = vmatpush1.msra.mxu0 0.0
    %1823 = vmatprep.subr.mxu0 0.0
    %1824 = vmatpush1.msra.mxu0 0.0
    %1825 = vmatprep.subr.mxu0 0.0
    %1826 = vmatpush1.msra.mxu0 0.0
    %1827 = vmatprep.subr.mxu0 0.0
    %1828 = vmatpush1.msra.mxu0 0.0
    %1829 = vmatprep.subr.mxu0 0.0
    %1830 = vmatpush1.msra.mxu0 0.0
    %1831 = vmatprep.subr.mxu0 0.0
    %1832 = vmatpush1.msra.mxu0 0.0
    %1833 = vmatprep.subr.mxu0 0.0
    %1834 = vmatpush1.msra.mxu0 0.0
    %1835 = vmatprep.subr.mxu0 0.0
    %1836 = vmatpush1.msra.mxu0 0.0
    %1837 = vmatprep.subr.mxu0 0.0
    %1838 = vmatpush1.msra.mxu0 0.0
    %1839 = vmatprep.subr.mxu0 0.0
    %1840 = vmatpush1.msra.mxu0 0.0
    %1841 = vmatprep.subr.mxu0 0.0
    %1842 = vmatpush1.msra.mxu0 0.0
    %1843 = vmatprep.subr.mxu0 0.0
    %1844 = vmatpush1.msra.mxu0 0.0
    %1845 = vmatprep.subr.mxu0 0.0
    %1846 = vmatpush1.msra.mxu0 0.0
    %1847 = vmatprep.subr.mxu0 0.0
    %1848 = vmatpush1.msra.mxu0 0.0
    %1849 = vmatprep.subr.mxu0 0.0
    %1850 = vmatpush1.msra.mxu0 0.0
    %1851 = vmatprep.subr.mxu0 0.0
    %1852 = vmatpush1.msra.mxu0 0.0
    %1853 = vmatprep.subr.mxu0 0.0
    %1854 = vmatpush1.msra.mxu0 0.0
    %1855 = vmatprep.subr.mxu0 0.0
    %1856 = vmatpush1.msra.mxu0 0.0
    %1857 = vmatprep.subr.mxu0 0.0
    %1858 = vmatpush1.msra.mxu0 0.0
    %1859 = vmatprep.subr.mxu0 0.0
    %1860 = vmatpush1.msra.mxu0 0.0
    %1861 = vmatprep.mubr.f32.mxu0 0.0
    %1862 = vmatmul.mubr.f32.gmra.mrb[0].mxu0 %v1795
    %v1863 = vpop.f32.mrb[0].mxu0
    %v1864 = vadd.f32 0.0, %v1863
    %v1865 = vpop.f32.mrb[0].mxu0
    %1866 = vdwg.mxu0
    %v1868 = vrot.slane %v1864, 4
    %v1870 = vadd.f32 %v1163, %v1868
    %v1871 = vxor.u32 %v1870, 2147483648
    %v1872 = vmul.f32 %v1871, 1.442695
    %v1873 = vpow.pop %v1872
    %v1874 = vadd.f32 %v1873, 1.0
    %v1875 = vrcp.pop %v1874
    %v1876 = vmul.f32 1.0, %v1875
    %v1877 = vtanh.pop %v1870
    %v1879 = vrot.slane %v1784, 6
    %v1881 = vmul.f32 %v1876, %v1879
    %1883 = vrot.lane.b32.xlu0 %v1877, 64
    %v1884 = vpop.permute.xlu0 %1883
    %v1886 = vmul.f32 %v1876, %v1884
    %1888 = vrot.lane.b32.xlu0 %v1886, 32
    %v1889 = vpop.permute.xlu0 %1888
    %v1891 = vadd.f32 %v1881, %v1889
    %v1892 = vtanh.pop %v1891
    %1894 = vrot.lane.b32.xlu0 %v1892, 64
    %v1895 = vpop.permute.xlu0 %1894
    %v1897 = vmul.f32 %v1876, %v1895
    %v1899 = vrot.slane %v1897, 4
    %1900 = vrot.lane.b32.xlu0 %v1899, 32
    %v1901 = vpop.permute.xlu0 %1900
    %v1902 = vsel %vm217, %v1901, 0
    %1904 = vmatprep.subr.mxu0 0.0
    %1905 = vmatpush1.msra.mxu0 %v1070
    %1906 = vmatprep.subr.mxu0 0.0
    %1907 = vmatpush1.msra.mxu0 %v1071
    %1908 = vmatprep.subr.mxu0 0.0
    %1909 = vmatpush1.msra.mxu0 %v1072
    %1910 = vmatprep.subr.mxu0 0.0
    %1911 = vmatpush1.msra.mxu0 %v1073
    %1912 = vmatprep.subr.mxu0 0.0
    %1913 = vmatpush1.msra.mxu0 0.0
    %1914 = vmatprep.subr.mxu0 0.0
    %1915 = vmatpush1.msra.mxu0 0.0
    %1916 = vmatprep.subr.mxu0 0.0
    %1917 = vmatpush1.msra.mxu0 0.0
    %1918 = vmatprep.subr.mxu0 0.0
    %1919 = vmatpush1.msra.mxu0 0.0
    %1920 = vmatprep.subr.mxu0 0.0
    %1921 = vmatpush1.msra.mxu0 0.0
    %1922 = vmatprep.subr.mxu0 0.0
    %1923 = vmatpush1.msra.mxu0 0.0
    %1924 = vmatprep.subr.mxu0 0.0
    %1925 = vmatpush1.msra.mxu0 0.0
    %1926 = vmatprep.subr.mxu0 0.0
    %1927 = vmatpush1.msra.mxu0 0.0
    %1928 = vmatprep.subr.mxu0 0.0
    %1929 = vmatpush1.msra.mxu0 0.0
    %1930 = vmatprep.subr.mxu0 0.0
    %1931 = vmatpush1.msra.mxu0 0.0
    %1932 = vmatprep.subr.mxu0 0.0
    %1933 = vmatpush1.msra.mxu0 0.0
    %1934 = vmatprep.subr.mxu0 0.0
    %1935 = vmatpush1.msra.mxu0 0.0
    %1936 = vmatprep.subr.mxu0 0.0
    %1937 = vmatpush1.msra.mxu0 0.0
    %1938 = vmatprep.subr.mxu0 0.0
    %1939 = vmatpush1.msra.mxu0 0.0
    %1940 = vmatprep.subr.mxu0 0.0
    %1941 = vmatpush1.msra.mxu0 0.0
    %1942 = vmatprep.subr.mxu0 0.0
    %1943 = vmatpush1.msra.mxu0 0.0
    %1944 = vmatprep.subr.mxu0 0.0
    %1945 = vmatpush1.msra.mxu0 0.0
    %1946 = vmatprep.subr.mxu0 0.0
    %1947 = vmatpush1.msra.mxu0 0.0
    %1948 = vmatprep.subr.mxu0 0.0
    %1949 = vmatpush1.msra.mxu0 0.0
    %1950 = vmatprep.subr.mxu0 0.0
    %1951 = vmatpush1.msra.mxu0 0.0
    %1952 = vmatprep.subr.mxu0 0.0
    %1953 = vmatpush1.msra.mxu0 0.0
    %1954 = vmatprep.subr.mxu0 0.0
    %1955 = vmatpush1.msra.mxu0 0.0
    %1956 = vmatprep.subr.mxu0 0.0
    %1957 = vmatpush1.msra.mxu0 0.0
    %1958 = vmatprep.subr.mxu0 0.0
    %1959 = vmatpush1.msra.mxu0 0.0
    %1960 = vmatprep.subr.mxu0 0.0
    %1961 = vmatpush1.msra.mxu0 0.0
    %1962 = vmatprep.subr.mxu0 0.0
    %1963 = vmatpush1.msra.mxu0 0.0
    %1964 = vmatprep.subr.mxu0 0.0
    %1965 = vmatpush1.msra.mxu0 0.0
    %1966 = vmatprep.subr.mxu0 0.0
    %1967 = vmatpush1.msra.mxu0 0.0
    %1968 = vmatprep.mubr.f32.mxu0 0.0
    %1969 = vmatmul.mubr.f32.gmra.mrb[0].mxu0 %v1902
    %v1970 = vpop.f32.mrb[0].mxu0
    %v1971 = vadd.f32 0.0, %v1970
    %v1972 = vpop.f32.mrb[0].mxu0
    %1973 = vdwg.mxu0
    %v1975 = vrot.slane %v1971, 2
    %v1977 = vadd.f32 %v1163, %v1975
    %v1978 = vxor.u32 %v1977, 2147483648
    %v1979 = vmul.f32 %v1978, 1.442695
    %v1980 = vpow.pop %v1979
    %v1981 = vadd.f32 %v1980, 1.0
    %v1982 = vrcp.pop %v1981
    %v1983 = vmul.f32 1.0, %v1982
    %v1984 = vtanh.pop %v1977
    %v1986 = vrot.slane %v1891, 6
    %v1988 = vmul.f32 %v1983, %v1986
    %1990 = vrot.lane.b32.xlu0 %v1984, 64
    %v1991 = vpop.permute.xlu0 %1990
    %v1993 = vmul.f32 %v1983, %v1991
    %1995 = vrot.lane.b32.xlu0 %v1993, 32
    %v1996 = vpop.permute.xlu0 %1995
    %v1998 = vadd.f32 %v1988, %v1996
    %v1999 = vtanh.pop %v1998
    %2001 = vrot.lane.b32.xlu0 %v1999, 64
    %v2002 = vpop.permute.xlu0 %2001
    %v2004 = vmul.f32 %v1983, %v2002
    %v2005 = vld [vmem:[%s7] sm:$0x1]
    %v2007 = vlaneseq
    %v2008 = vshrl.u32 %v2007, 7
    %v2009 = vsub.s32 0, %v2008
    %v2010 = vrot.slane %v2005, %v2009
    %2011 = vrot.lane.b32.xlu0 %v2010, 96
    %v2012 = vpop.permute.xlu0 %2011
    %v2014 = vmul.f32 %v2004, %v2012
    %2016 = vrot.lane.b32.xlu0 %v2014, 32
    %v2017 = vpop.permute.xlu0 %2016
    %vm2019 = vcmask 261126
    %v2020 = vsel %vm2019, %v2017, 0.0
    %2021 = vadd.xlane.f32.xlu0 %v2020
    %v2022 = vpop.xlane.xlu0 %2021
    %v2023 = vld [vmem:[#allocation2] sm:$0x1]
    %v2025 = vlaneseq
    %v2026 = vshrl.u32 %v2025, 7
    %v2027 = vsub.s32 0, %v2026
    %v2028 = vrot.slane %v2023, %v2027
    %v2030 = vadd.f32 %v2022, %v2028
    %vm2031 = vcmask 7174
    %2032 = vst.msk [vmem:[%s9 - $0x6] sm:$0xc0] %vm2031, %v2030
    // Predicated region
    $region50: #{tpu_custom_call.1} parent=1 // pred_check
      _
    $region51: #{tpu_custom_call.1} parent=1 // pred_check_branch
      %2034 = sbr.rel (0) target = $region53
    $region52: #{tpu_custom_call.1} parent=1 // pred_region
      _
    $region53: #{tpu_custom_call.1} parent=1 // pred_fallthru
      _
    // Predicated region
    $region54: #{tpu_custom_call.1} parent=1 // pred_check
      _
    $region55: #{tpu_custom_call.1} parent=1 // pred_check_branch
      %2036 = sbr.rel (0) target = $region57
    $region56: #{tpu_custom_call.1} parent=1 // pred_region
      _
    $region57: #{tpu_custom_call.1} parent=1 // pred_fallthru
      _
    %2037 = vsyncpa [#allocation4], 1
    %2038 = vsyncpa [#allocation6], 1

</llo_original>
